<compile_context>
chip_gen: v7x
topology: tpu7x:2x2x1
jax: 0.10.0
libtpu: 0.0.40
codegen_flags: <defaults>
</compile_context>

<pallas_src>
import functools
import math

import jax
import jax.numpy as jnp
from jax.experimental import pallas as pl
from jax.experimental.pallas import tpu as pltpu


# ------------------------------ Pallas kernel -------------------------------
def mhsa_kernel(x_ref, wq_ref, wk_ref, wv_ref, wo_ref,
                bq_ref, bk_ref, bv_ref, bo_ref,
                out_ref, *, num_heads, head_size):
    """Fused multi-head self-attention for one block of batch elements.

    x_ref  : (BB, S, H) input block
    w*_ref : (H, H)     projection weights (input-major, y = x @ W + b)
    b*_ref : (1, H)     biases
    out_ref: (BB, S, H) output block
    """
    bb, s, hidden = x_ref.shape
    m = bb * s
    scale = 1.0 / math.sqrt(head_size)

    # Flatten the batch block into the matmul M dim: one (BB*S, H) @ (H, H)
    # MXU pass per projection instead of BB separate (S, H) dots.
    xf = x_ref[...].reshape(m, hidden)

    q = (jnp.dot(xf, wq_ref[...], preferred_element_type=jnp.float32)
         + bq_ref[...]) * scale          # fold 1/sqrt(hs) into Q once
    k = jnp.dot(xf, wk_ref[...], preferred_element_type=jnp.float32) + bk_ref[...]
    v = jnp.dot(xf, wv_ref[...], preferred_element_type=jnp.float32) + bv_ref[...]

    q3 = q.reshape(bb, s, hidden)
    k3 = k.reshape(bb, s, hidden)
    v3 = v.reshape(bb, s, hidden)

    # Output accumulator starts from the (broadcast-once) output bias; each
    # head folds its context straight into the output projection, so no
    # lane-axis concatenate of per-head contexts is needed.
    acc = jnp.broadcast_to(bo_ref[...], (m, hidden)).astype(jnp.float32)

    for h in range(num_heads):           # short static unroll over heads
        lo = h * head_size
        qh = q3[:, :, lo:lo + head_size]         # (BB, S, hs)
        kh = k3[:, :, lo:lo + head_size]
        vh = v3[:, :, lo:lo + head_size]

        # scores: batched over the batch block, contract the head dim
        # (no materialized transpose of K).
        sc = jnp.einsum("bqd,bkd->bqk", qh, kh,
                        preferred_element_type=jnp.float32)    # (BB, S, S)

        # numerically-stable softmax with deferred normalization
        mx = jnp.max(sc, axis=-1, keepdims=True)
        p = jnp.exp(sc - mx)                                    # unnormalized
        l = jnp.sum(p, axis=-1, keepdims=True)                  # (BB, S, 1)

        ctx = jnp.einsum("bqk,bkd->bqd", p, vh,
                         preferred_element_type=jnp.float32)    # (BB, S, hs)
        # Normalize the (S, hs) context instead of the (S, S) probabilities.
        # TODO(synk): switch to pl.reciprocal(l, approx=True) if the 1e-4
        # tolerance against the f32 reference can be relaxed.
        ctx = ctx * (1.0 / l)

        # Fold this head's context straight into the output projection.
        acc = acc + jnp.dot(ctx.reshape(m, head_size),
                            wo_ref[lo:lo + head_size, :],
                            preferred_element_type=jnp.float32)

    out_ref[...] = acc.reshape(bb, s, hidden)


# --------------------------------- wrapper ----------------------------------
def multi_head_self_attention(params, inputs, *, num_heads, batch_block=None):
    """inputs: (batch, seq, hidden) float32.  Matches the PyTorch forward()."""
    n, seq, hidden = inputs.shape
    assert hidden % num_heads == 0
    head_size = hidden // num_heads

    if batch_block is None:
        # Target ~256 rows in the flattened (bb*seq, H) projection matmuls
        # (fills a v6e/v7x 256-row MXU pass; two passes on v5e's 128-row MXU),
        # capped so double-buffered x/out blocks stay well inside v7x's 64 MiB.
        bb = max(1, pl.cdiv(256, seq))
        per_batch_bytes = 2 * 2 * seq * hidden * 4     # in+out, 2x buffered, f32
        bb = max(1, min(bb, (8 * 1024 * 1024) // max(per_batch_bytes, 1)))
    else:
        bb = int(batch_block)
    bb = max(1, min(bb, n))
    # v7x megacore: guarantee >=2 grid steps whenever there are >=2 batch
    # elements so both TensorCores get work (neutral on single-TC v5e/v6e).
    if n >= 2 and pl.cdiv(n, bb) < 2:
        bb = pl.cdiv(n, 2)

    n_pad = pl.cdiv(n, bb) * bb
    x = inputs.astype(jnp.float32)
    if n_pad != n:
        x = jnp.pad(x, ((0, n_pad - n), (0, 0), (0, 0)))

    block_spec = pl.BlockSpec((bb, seq, hidden), lambda i: (i, 0, 0))
    weight_spec = pl.BlockSpec((hidden, hidden), lambda i: (0, 0))   # resident
    bias_spec = pl.BlockSpec((1, hidden), lambda i: (0, 0))          # resident

    out = pl.pallas_call(
        functools.partial(mhsa_kernel, num_heads=num_heads, head_size=head_size),
        out_shape=jax.ShapeDtypeStruct((n_pad, seq, hidden), jnp.float32),
        grid=(n_pad // bb,),
        in_specs=[block_spec,
                  weight_spec, weight_spec, weight_spec, weight_spec,
                  bias_spec, bias_spec, bias_spec, bias_spec],
        out_specs=block_spec,
        compiler_params=pltpu.CompilerParams(
            dimension_semantics=("parallel",),      # shard batch blocks over TCs
            vmem_limit_bytes=32 * 1024 * 1024),     # raise v5e's 16 MiB default
    )(x,
      params["wq"], params["wk"], params["wv"], params["wo"],
      params["bq"], params["bk"], params["bv"], params["bo"])

    out = out[:n]
    if seq == 1:                                    # torch: output.squeeze(1)
        out = out[:, 0]
    return out


# ------------------------- pure-JAX reference (check) ------------------------
def mhsa_reference(params, inputs, *, num_heads):
    n, seq, hidden = inputs.shape
    head_size = hidden // num_heads

    def lin(x, w, b):
        return x @ w + b

    q = lin(inputs, params["wq"], params["bq"]).reshape(n, seq, num_heads, head_size)
    k = lin(inputs, params["wk"], params["bk"]).reshape(n, seq, num_heads, head_size)
    v = lin(inputs, params["wv"], params["bv"]).reshape(n, seq, num_heads, head_size)
    q = q.transpose(0, 2, 1, 3)
    k = k.transpose(0, 2, 1, 3)
    v = v.transpose(0, 2, 1, 3)
    s = jnp.einsum("bhqd,bhkd->bhqk", q, k) / math.sqrt(head_size)
    p = jax.nn.softmax(s, axis=-1)
    ctx = jnp.einsum("bhqk,bhkd->bhqd", p, v)
    ctx = ctx.transpose(0, 2, 1, 3).reshape(n, seq, hidden)
    out = lin(ctx, params["wo"], params["bo"])
    if seq == 1:
        out = out[:, 0]
    return out


# ------------------------------ parameter init -------------------------------
def init_params(key, hidden):
    ks = iter(jax.random.split(key, 8))

    def lin(din, dout):
        w = jax.random.normal(next(ks), (din, dout), jnp.float32) / math.sqrt(din)
        b = 0.01 * jax.random.normal(next(ks), (1, dout), jnp.float32)
        return w, b

    wq, bq = lin(hidden, hidden)
    wk, bk = lin(hidden, hidden)
    wv, bv = lin(hidden, hidden)
    wo, bo = lin(hidden, hidden)
    return dict(wq=wq, bq=bq, wk=wk, bk=bk, wv=wv, bv=bv, wo=wo, bo=bo)


# ----------------------------------- main ------------------------------------
if __name__ == "__main__":
    key = jax.random.PRNGKey(0)
    k_x, k_p = jax.random.split(key)

    batch, seq, hidden, num_heads = 2, 8, 32, 4
    x = jax.random.normal(k_x, (batch, seq, hidden), jnp.float32)
    params = init_params(k_p, hidden)

    out = multi_head_self_attention(params, x, num_heads=num_heads)
    jax.block_until_ready(out)

    ref = mhsa_reference(params, x, num_heads=num_heads)
    assert out.shape == (batch, seq, hidden)
    assert jnp.max(jnp.abs(out - ref)) < 1e-4, "Pallas output mismatch vs JAX reference"

    print("KERNEL_OK")
</pallas_src>

<mosaic_0001>
module attributes {stable_mosaic.version = 11 : i64} {
  func.func @mhsa_kernel(%arg0: i32, %arg1: memref<1x8x32xf32, #tpu.memory_space<vmem>>, %arg2: memref<32x32xf32, #tpu.memory_space<vmem>>, %arg3: memref<32x32xf32, #tpu.memory_space<vmem>>, %arg4: memref<32x32xf32, #tpu.memory_space<vmem>>, %arg5: memref<32x32xf32, #tpu.memory_space<vmem>>, %arg6: memref<1x32xf32, #tpu.memory_space<vmem>>, %arg7: memref<1x32xf32, #tpu.memory_space<vmem>>, %arg8: memref<1x32xf32, #tpu.memory_space<vmem>>, %arg9: memref<1x32xf32, #tpu.memory_space<vmem>>, %arg10: memref<1x8x32xf32, #tpu.memory_space<vmem>>) attributes {dimension_semantics = [#tpu.dimension_semantics<parallel>], iteration_bounds = array<i64: 2>, scalar_prefetch = 0 : i64, scratch_operands = 0 : i64, tpu.core_type = #tpu.core_type<tc>, window_params = [{transform_indices = @transform_0, window_bounds = array<i64: 1, 8, 32>}, {pipeline_mode = #tpu.pipeline_mode<synchronous>, transform_indices = @transform_1, window_bounds = array<i64: 32, 32>}, {pipeline_mode = #tpu.pipeline_mode<synchronous>, transform_indices = @transform_2, window_bounds = array<i64: 32, 32>}, {pipeline_mode = #tpu.pipeline_mode<synchronous>, transform_indices = @transform_3, window_bounds = array<i64: 32, 32>}, {pipeline_mode = #tpu.pipeline_mode<synchronous>, transform_indices = @transform_4, window_bounds = array<i64: 32, 32>}, {pipeline_mode = #tpu.pipeline_mode<synchronous>, transform_indices = @transform_5, window_bounds = array<i64: 1, 32>}, {pipeline_mode = #tpu.pipeline_mode<synchronous>, transform_indices = @transform_6, window_bounds = array<i64: 1, 32>}, {pipeline_mode = #tpu.pipeline_mode<synchronous>, transform_indices = @transform_7, window_bounds = array<i64: 1, 32>}, {pipeline_mode = #tpu.pipeline_mode<synchronous>, transform_indices = @transform_8, window_bounds = array<i64: 1, 32>}, {transform_indices = @transform_9, window_bounds = array<i64: 1, 8, 32>}]} {
    %c0 = arith.constant 0 : index
    %c0_0 = arith.constant 0 : index
    %c0_1 = arith.constant 0 : index
    %0 = vector.load %arg1[%c0, %c0_0, %c0_1] : memref<1x8x32xf32, #tpu.memory_space<vmem>>, vector<1x8x32xf32>
    %1 = vector.shape_cast %0 : vector<1x8x32xf32> to vector<8x32xf32>
    %c0_2 = arith.constant 0 : index
    %c0_3 = arith.constant 0 : index
    %2 = vector.load %arg2[%c0_2, %c0_3] : memref<32x32xf32, #tpu.memory_space<vmem>>, vector<32x32xf32>
    %cst = arith.constant dense<0.000000e+00> : vector<8x32xf32>
    %3 = tpu.matmul %1, %2, %cst {dimension_numbers = #tpu.dot_dimension_numbers<[1], [0], [0], [1], [0, 0, 1, 1], [], []>} : vector<8x32xf32>, vector<32x32xf32>, vector<8x32xf32> -> vector<8x32xf32>
    %c0_4 = arith.constant 0 : index
    %c0_5 = arith.constant 0 : index
    %4 = vector.load %arg6[%c0_4, %c0_5] : memref<1x32xf32, #tpu.memory_space<vmem>>, vector<1x32xf32>
    %5 = vector.broadcast %4 : vector<1x32xf32> to vector<8x32xf32>
    %6 = arith.addf %3, %5 : vector<8x32xf32>
    %cst_6 = arith.constant 0.353553385 : f32
    %7 = vector.broadcast %cst_6 : f32 to vector<8x32xf32>
    %8 = arith.mulf %6, %7 : vector<8x32xf32>
    %c0_7 = arith.constant 0 : index
    %c0_8 = arith.constant 0 : index
    %9 = vector.load %arg3[%c0_7, %c0_8] : memref<32x32xf32, #tpu.memory_space<vmem>>, vector<32x32xf32>
    %cst_9 = arith.constant dense<0.000000e+00> : vector<8x32xf32>
    %10 = tpu.matmul %1, %9, %cst_9 {dimension_numbers = #tpu.dot_dimension_numbers<[1], [0], [0], [1], [0, 0, 1, 1], [], []>} : vector<8x32xf32>, vector<32x32xf32>, vector<8x32xf32> -> vector<8x32xf32>
    %c0_10 = arith.constant 0 : index
    %c0_11 = arith.constant 0 : index
    %11 = vector.load %arg7[%c0_10, %c0_11] : memref<1x32xf32, #tpu.memory_space<vmem>>, vector<1x32xf32>
    %12 = vector.broadcast %11 : vector<1x32xf32> to vector<8x32xf32>
    %13 = arith.addf %10, %12 : vector<8x32xf32>
    %c0_12 = arith.constant 0 : index
    %c0_13 = arith.constant 0 : index
    %14 = vector.load %arg4[%c0_12, %c0_13] : memref<32x32xf32, #tpu.memory_space<vmem>>, vector<32x32xf32>
    %cst_14 = arith.constant dense<0.000000e+00> : vector<8x32xf32>
    %15 = tpu.matmul %1, %14, %cst_14 {dimension_numbers = #tpu.dot_dimension_numbers<[1], [0], [0], [1], [0, 0, 1, 1], [], []>} : vector<8x32xf32>, vector<32x32xf32>, vector<8x32xf32> -> vector<8x32xf32>
    %c0_15 = arith.constant 0 : index
    %c0_16 = arith.constant 0 : index
    %16 = vector.load %arg8[%c0_15, %c0_16] : memref<1x32xf32, #tpu.memory_space<vmem>>, vector<1x32xf32>
    %17 = vector.broadcast %16 : vector<1x32xf32> to vector<8x32xf32>
    %18 = arith.addf %15, %17 : vector<8x32xf32>
    %19 = vector.shape_cast %8 : vector<8x32xf32> to vector<1x8x32xf32>
    %20 = vector.shape_cast %13 : vector<8x32xf32> to vector<1x8x32xf32>
    %21 = vector.shape_cast %18 : vector<8x32xf32> to vector<1x8x32xf32>
    %c0_17 = arith.constant 0 : index
    %c0_18 = arith.constant 0 : index
    %22 = vector.load %arg9[%c0_17, %c0_18] : memref<1x32xf32, #tpu.memory_space<vmem>>, vector<1x32xf32>
    %23 = vector.shape_cast %22 : vector<1x32xf32> to vector<1x32xf32>
    %24 = vector.broadcast %23 : vector<1x32xf32> to vector<8x32xf32>
    %25 = vector.extract_strided_slice %19 {offsets = [0, 0, 0], sizes = [1, 8, 8], strides = [1, 1, 1]} : vector<1x8x32xf32> to vector<1x8x8xf32>
    %26 = vector.extract_strided_slice %20 {offsets = [0, 0, 0], sizes = [1, 8, 8], strides = [1, 1, 1]} : vector<1x8x32xf32> to vector<1x8x8xf32>
    %27 = vector.extract_strided_slice %21 {offsets = [0, 0, 0], sizes = [1, 8, 8], strides = [1, 1, 1]} : vector<1x8x32xf32> to vector<1x8x8xf32>
    "tpu.trace_start"() <{level = 10 : i32, message = "bqd,bkd->bqk"}> : () -> ()
    %cst_19 = arith.constant dense<0.000000e+00> : vector<1x8x8xf32>
    %28 = tpu.matmul %25, %26, %cst_19 {dimension_numbers = #tpu.dot_dimension_numbers<[2], [2], [1], [1], [0, 0, 0, 1, 1, 1], [0], [0]>} : vector<1x8x8xf32>, vector<1x8x8xf32>, vector<1x8x8xf32> -> vector<1x8x8xf32>
    "tpu.trace_stop"() : () -> ()
    %cst_20 = arith.constant dense<0xFF800000> : vector<1x8xf32>
    %29 = vector.multi_reduction <maximumf>, %28, %cst_20 [2] : vector<1x8x8xf32> to vector<1x8xf32>
    %30 = vector.shape_cast %29 : vector<1x8xf32> to vector<1x8x1xf32>
    %31 = vector.broadcast %30 : vector<1x8x1xf32> to vector<1x8x8xf32>
    %32 = arith.subf %28, %31 : vector<1x8x8xf32>
    %33 = math.exp %32 : vector<1x8x8xf32>
    %cst_21 = arith.constant dense<0.000000e+00> : vector<1x8xf32>
    %34 = vector.multi_reduction <add>, %33, %cst_21 [2] : vector<1x8x8xf32> to vector<1x8xf32>
    %35 = vector.shape_cast %34 : vector<1x8xf32> to vector<1x8x1xf32>
    "tpu.trace_start"() <{level = 10 : i32, message = "bqk,bkd->bqd"}> : () -> ()
    %cst_22 = arith.constant dense<0.000000e+00> : vector<1x8x8xf32>
    %36 = tpu.matmul %33, %27, %cst_22 {dimension_numbers = #tpu.dot_dimension_numbers<[2], [1], [1], [2], [0, 0, 0, 1, 1, 2], [0], [0]>} : vector<1x8x8xf32>, vector<1x8x8xf32>, vector<1x8x8xf32> -> vector<1x8x8xf32>
    "tpu.trace_stop"() : () -> ()
    %cst_23 = arith.constant 1.000000e+00 : f32
    %37 = vector.broadcast %cst_23 : f32 to vector<1x8x1xf32>
    %38 = arith.divf %37, %35 : vector<1x8x1xf32>
    %39 = vector.broadcast %38 : vector<1x8x1xf32> to vector<1x8x8xf32>
    %40 = arith.mulf %36, %39 : vector<1x8x8xf32>
    %41 = vector.shape_cast %40 : vector<1x8x8xf32> to vector<8x8xf32>
    %c0_24 = arith.constant 0 : index
    %c0_25 = arith.constant 0 : index
    %42 = vector.load %arg5[%c0_24, %c0_25] : memref<32x32xf32, #tpu.memory_space<vmem>>, vector<8x32xf32>
    %cst_26 = arith.constant dense<0.000000e+00> : vector<8x32xf32>
    %43 = tpu.matmul %41, %42, %cst_26 {dimension_numbers = #tpu.dot_dimension_numbers<[1], [0], [0], [1], [0, 0, 1, 1], [], []>} : vector<8x8xf32>, vector<8x32xf32>, vector<8x32xf32> -> vector<8x32xf32>
    %44 = arith.addf %24, %43 : vector<8x32xf32>
    %45 = vector.extract_strided_slice %19 {offsets = [0, 0, 8], sizes = [1, 8, 8], strides = [1, 1, 1]} : vector<1x8x32xf32> to vector<1x8x8xf32>
    %46 = vector.extract_strided_slice %20 {offsets = [0, 0, 8], sizes = [1, 8, 8], strides = [1, 1, 1]} : vector<1x8x32xf32> to vector<1x8x8xf32>
    %47 = vector.extract_strided_slice %21 {offsets = [0, 0, 8], sizes = [1, 8, 8], strides = [1, 1, 1]} : vector<1x8x32xf32> to vector<1x8x8xf32>
    "tpu.trace_start"() <{level = 10 : i32, message = "bqd,bkd->bqk"}> : () -> ()
    %cst_27 = arith.constant dense<0.000000e+00> : vector<1x8x8xf32>
    %48 = tpu.matmul %45, %46, %cst_27 {dimension_numbers = #tpu.dot_dimension_numbers<[2], [2], [1], [1], [0, 0, 0, 1, 1, 1], [0], [0]>} : vector<1x8x8xf32>, vector<1x8x8xf32>, vector<1x8x8xf32> -> vector<1x8x8xf32>
    "tpu.trace_stop"() : () -> ()
    %cst_28 = arith.constant dense<0xFF800000> : vector<1x8xf32>
    %49 = vector.multi_reduction <maximumf>, %48, %cst_28 [2] : vector<1x8x8xf32> to vector<1x8xf32>
    %50 = vector.shape_cast %49 : vector<1x8xf32> to vector<1x8x1xf32>
    %51 = vector.broadcast %50 : vector<1x8x1xf32> to vector<1x8x8xf32>
    %52 = arith.subf %48, %51 : vector<1x8x8xf32>
    %53 = math.exp %52 : vector<1x8x8xf32>
    %cst_29 = arith.constant dense<0.000000e+00> : vector<1x8xf32>
    %54 = vector.multi_reduction <add>, %53, %cst_29 [2] : vector<1x8x8xf32> to vector<1x8xf32>
    %55 = vector.shape_cast %54 : vector<1x8xf32> to vector<1x8x1xf32>
    "tpu.trace_start"() <{level = 10 : i32, message = "bqk,bkd->bqd"}> : () -> ()
    %cst_30 = arith.constant dense<0.000000e+00> : vector<1x8x8xf32>
    %56 = tpu.matmul %53, %47, %cst_30 {dimension_numbers = #tpu.dot_dimension_numbers<[2], [1], [1], [2], [0, 0, 0, 1, 1, 2], [0], [0]>} : vector<1x8x8xf32>, vector<1x8x8xf32>, vector<1x8x8xf32> -> vector<1x8x8xf32>
    "tpu.trace_stop"() : () -> ()
    %cst_31 = arith.constant 1.000000e+00 : f32
    %57 = vector.broadcast %cst_31 : f32 to vector<1x8x1xf32>
    %58 = arith.divf %57, %55 : vector<1x8x1xf32>
    %59 = vector.broadcast %58 : vector<1x8x1xf32> to vector<1x8x8xf32>
    %60 = arith.mulf %56, %59 : vector<1x8x8xf32>
    %61 = vector.shape_cast %60 : vector<1x8x8xf32> to vector<8x8xf32>
    %c8 = arith.constant 8 : index
    %c0_32 = arith.constant 0 : index
    %62 = vector.load %arg5[%c8, %c0_32] : memref<32x32xf32, #tpu.memory_space<vmem>>, vector<8x32xf32>
    %cst_33 = arith.constant dense<0.000000e+00> : vector<8x32xf32>
    %63 = tpu.matmul %61, %62, %cst_33 {dimension_numbers = #tpu.dot_dimension_numbers<[1], [0], [0], [1], [0, 0, 1, 1], [], []>} : vector<8x8xf32>, vector<8x32xf32>, vector<8x32xf32> -> vector<8x32xf32>
    %64 = arith.addf %44, %63 : vector<8x32xf32>
    %65 = vector.extract_strided_slice %19 {offsets = [0, 0, 16], sizes = [1, 8, 8], strides = [1, 1, 1]} : vector<1x8x32xf32> to vector<1x8x8xf32>
    %66 = vector.extract_strided_slice %20 {offsets = [0, 0, 16], sizes = [1, 8, 8], strides = [1, 1, 1]} : vector<1x8x32xf32> to vector<1x8x8xf32>
    %67 = vector.extract_strided_slice %21 {offsets = [0, 0, 16], sizes = [1, 8, 8], strides = [1, 1, 1]} : vector<1x8x32xf32> to vector<1x8x8xf32>
    "tpu.trace_start"() <{level = 10 : i32, message = "bqd,bkd->bqk"}> : () -> ()
    %cst_34 = arith.constant dense<0.000000e+00> : vector<1x8x8xf32>
    %68 = tpu.matmul %65, %66, %cst_34 {dimension_numbers = #tpu.dot_dimension_numbers<[2], [2], [1], [1], [0, 0, 0, 1, 1, 1], [0], [0]>} : vector<1x8x8xf32>, vector<1x8x8xf32>, vector<1x8x8xf32> -> vector<1x8x8xf32>
    "tpu.trace_stop"() : () -> ()
    %cst_35 = arith.constant dense<0xFF800000> : vector<1x8xf32>
    %69 = vector.multi_reduction <maximumf>, %68, %cst_35 [2] : vector<1x8x8xf32> to vector<1x8xf32>
    %70 = vector.shape_cast %69 : vector<1x8xf32> to vector<1x8x1xf32>
    %71 = vector.broadcast %70 : vector<1x8x1xf32> to vector<1x8x8xf32>
    %72 = arith.subf %68, %71 : vector<1x8x8xf32>
    %73 = math.exp %72 : vector<1x8x8xf32>
    %cst_36 = arith.constant dense<0.000000e+00> : vector<1x8xf32>
    %74 = vector.multi_reduction <add>, %73, %cst_36 [2] : vector<1x8x8xf32> to vector<1x8xf32>
    %75 = vector.shape_cast %74 : vector<1x8xf32> to vector<1x8x1xf32>
    "tpu.trace_start"() <{level = 10 : i32, message = "bqk,bkd->bqd"}> : () -> ()
    %cst_37 = arith.constant dense<0.000000e+00> : vector<1x8x8xf32>
    %76 = tpu.matmul %73, %67, %cst_37 {dimension_numbers = #tpu.dot_dimension_numbers<[2], [1], [1], [2], [0, 0, 0, 1, 1, 2], [0], [0]>} : vector<1x8x8xf32>, vector<1x8x8xf32>, vector<1x8x8xf32> -> vector<1x8x8xf32>
    "tpu.trace_stop"() : () -> ()
    %cst_38 = arith.constant 1.000000e+00 : f32
    %77 = vector.broadcast %cst_38 : f32 to vector<1x8x1xf32>
    %78 = arith.divf %77, %75 : vector<1x8x1xf32>
    %79 = vector.broadcast %78 : vector<1x8x1xf32> to vector<1x8x8xf32>
    %80 = arith.mulf %76, %79 : vector<1x8x8xf32>
    %81 = vector.shape_cast %80 : vector<1x8x8xf32> to vector<8x8xf32>
    %c16 = arith.constant 16 : index
    %c0_39 = arith.constant 0 : index
    %82 = vector.load %arg5[%c16, %c0_39] : memref<32x32xf32, #tpu.memory_space<vmem>>, vector<8x32xf32>
    %cst_40 = arith.constant dense<0.000000e+00> : vector<8x32xf32>
    %83 = tpu.matmul %81, %82, %cst_40 {dimension_numbers = #tpu.dot_dimension_numbers<[1], [0], [0], [1], [0, 0, 1, 1], [], []>} : vector<8x8xf32>, vector<8x32xf32>, vector<8x32xf32> -> vector<8x32xf32>
    %84 = arith.addf %64, %83 : vector<8x32xf32>
    %85 = vector.extract_strided_slice %19 {offsets = [0, 0, 24], sizes = [1, 8, 8], strides = [1, 1, 1]} : vector<1x8x32xf32> to vector<1x8x8xf32>
    %86 = vector.extract_strided_slice %20 {offsets = [0, 0, 24], sizes = [1, 8, 8], strides = [1, 1, 1]} : vector<1x8x32xf32> to vector<1x8x8xf32>
    %87 = vector.extract_strided_slice %21 {offsets = [0, 0, 24], sizes = [1, 8, 8], strides = [1, 1, 1]} : vector<1x8x32xf32> to vector<1x8x8xf32>
    "tpu.trace_start"() <{level = 10 : i32, message = "bqd,bkd->bqk"}> : () -> ()
    %cst_41 = arith.constant dense<0.000000e+00> : vector<1x8x8xf32>
    %88 = tpu.matmul %85, %86, %cst_41 {dimension_numbers = #tpu.dot_dimension_numbers<[2], [2], [1], [1], [0, 0, 0, 1, 1, 1], [0], [0]>} : vector<1x8x8xf32>, vector<1x8x8xf32>, vector<1x8x8xf32> -> vector<1x8x8xf32>
    "tpu.trace_stop"() : () -> ()
    %cst_42 = arith.constant dense<0xFF800000> : vector<1x8xf32>
    %89 = vector.multi_reduction <maximumf>, %88, %cst_42 [2] : vector<1x8x8xf32> to vector<1x8xf32>
    %90 = vector.shape_cast %89 : vector<1x8xf32> to vector<1x8x1xf32>
    %91 = vector.broadcast %90 : vector<1x8x1xf32> to vector<1x8x8xf32>
    %92 = arith.subf %88, %91 : vector<1x8x8xf32>
    %93 = math.exp %92 : vector<1x8x8xf32>
    %cst_43 = arith.constant dense<0.000000e+00> : vector<1x8xf32>
    %94 = vector.multi_reduction <add>, %93, %cst_43 [2] : vector<1x8x8xf32> to vector<1x8xf32>
    %95 = vector.shape_cast %94 : vector<1x8xf32> to vector<1x8x1xf32>
    "tpu.trace_start"() <{level = 10 : i32, message = "bqk,bkd->bqd"}> : () -> ()
    %cst_44 = arith.constant dense<0.000000e+00> : vector<1x8x8xf32>
    %96 = tpu.matmul %93, %87, %cst_44 {dimension_numbers = #tpu.dot_dimension_numbers<[2], [1], [1], [2], [0, 0, 0, 1, 1, 2], [0], [0]>} : vector<1x8x8xf32>, vector<1x8x8xf32>, vector<1x8x8xf32> -> vector<1x8x8xf32>
    "tpu.trace_stop"() : () -> ()
    %cst_45 = arith.constant 1.000000e+00 : f32
    %97 = vector.broadcast %cst_45 : f32 to vector<1x8x1xf32>
    %98 = arith.divf %97, %95 : vector<1x8x1xf32>
    %99 = vector.broadcast %98 : vector<1x8x1xf32> to vector<1x8x8xf32>
    %100 = arith.mulf %96, %99 : vector<1x8x8xf32>
    %101 = vector.shape_cast %100 : vector<1x8x8xf32> to vector<8x8xf32>
    %c24 = arith.constant 24 : index
    %c0_46 = arith.constant 0 : index
    %102 = vector.load %arg5[%c24, %c0_46] : memref<32x32xf32, #tpu.memory_space<vmem>>, vector<8x32xf32>
    %cst_47 = arith.constant dense<0.000000e+00> : vector<8x32xf32>
    %103 = tpu.matmul %101, %102, %cst_47 {dimension_numbers = #tpu.dot_dimension_numbers<[1], [0], [0], [1], [0, 0, 1, 1], [], []>} : vector<8x8xf32>, vector<8x32xf32>, vector<8x32xf32> -> vector<8x32xf32>
    %104 = arith.addf %84, %103 : vector<8x32xf32>
    %105 = vector.shape_cast %104 : vector<8x32xf32> to vector<1x8x32xf32>
    %c0_48 = arith.constant 0 : index
    %c0_49 = arith.constant 0 : index
    %c0_50 = arith.constant 0 : index
    %106 = vector.load %arg10[%c0_48, %c0_49, %c0_50] : memref<1x8x32xf32, #tpu.memory_space<vmem>>, vector<1x8x32xf32>
    tpu.vector_store %arg10[%c0_48, %c0_49, %c0_50], %105 {strides = array<i32>} : memref<1x8x32xf32, #tpu.memory_space<vmem>>, vector<1x8x32xf32>,
    return
  }
  func.func @transform_0(%arg0: i32) -> (i32, i32, i32) {
    %c0_i32 = arith.constant 0 : i32
    %c0_i32_0 = arith.constant 0 : i32
    %c0_i32_1 = arith.constant 0 : i32
    return %arg0, %c0_i32, %c0_i32_0 : i32, i32, i32
  }
  func.func @transform_1(%arg0: i32) -> (i32, i32) {
    %c0_i32 = arith.constant 0 : i32
    %c0_i32_0 = arith.constant 0 : i32
    %c0_i32_1 = arith.constant 0 : i32
    return %c0_i32, %c0_i32_0 : i32, i32
  }
  func.func @transform_2(%arg0: i32) -> (i32, i32) {
    %c0_i32 = arith.constant 0 : i32
    %c0_i32_0 = arith.constant 0 : i32
    %c0_i32_1 = arith.constant 0 : i32
    return %c0_i32, %c0_i32_0 : i32, i32
  }
  func.func @transform_3(%arg0: i32) -> (i32, i32) {
    %c0_i32 = arith.constant 0 : i32
    %c0_i32_0 = arith.constant 0 : i32
    %c0_i32_1 = arith.constant 0 : i32
    return %c0_i32, %c0_i32_0 : i32, i32
  }
  func.func @transform_4(%arg0: i32) -> (i32, i32) {
    %c0_i32 = arith.constant 0 : i32
    %c0_i32_0 = arith.constant 0 : i32
    %c0_i32_1 = arith.constant 0 : i32
    return %c0_i32, %c0_i32_0 : i32, i32
  }
  func.func @transform_5(%arg0: i32) -> (i32, i32) {
    %c0_i32 = arith.constant 0 : i32
    %c0_i32_0 = arith.constant 0 : i32
    %c0_i32_1 = arith.constant 0 : i32
    return %c0_i32, %c0_i32_0 : i32, i32
  }
  func.func @transform_6(%arg0: i32) -> (i32, i32) {
    %c0_i32 = arith.constant 0 : i32
    %c0_i32_0 = arith.constant 0 : i32
    %c0_i32_1 = arith.constant 0 : i32
    return %c0_i32, %c0_i32_0 : i32, i32
  }
  func.func @transform_7(%arg0: i32) -> (i32, i32) {
    %c0_i32 = arith.constant 0 : i32
    %c0_i32_0 = arith.constant 0 : i32
    %c0_i32_1 = arith.constant 0 : i32
    return %c0_i32, %c0_i32_0 : i32, i32
  }
  func.func @transform_8(%arg0: i32) -> (i32, i32) {
    %c0_i32 = arith.constant 0 : i32
    %c0_i32_0 = arith.constant 0 : i32
    %c0_i32_1 = arith.constant 0 : i32
    return %c0_i32, %c0_i32_0 : i32, i32
  }
  func.func @transform_9(%arg0: i32) -> (i32, i32, i32) {
    %c0_i32 = arith.constant 0 : i32
    %c0_i32_0 = arith.constant 0 : i32
    %c0_i32_1 = arith.constant 0 : i32
    return %arg0, %c0_i32, %c0_i32_0 : i32, i32, i32
  }
}

</mosaic_0001>

<llo_original>
// kernel: tpu_custom_call.1
$region0: #{tpu_custom_call.1}
  #allocation0 [shape = 'u32[]', space=smem, size = 0x4, offset = 0x4, fixed_abs, tag = 'smem constant byte address 0x4 - core index']
  #allocation1 [shape = 'u32[144,128]{1,0:T(1,128)}', space=vmem, size = 0x12000, scoped, tag = 'internal scratch']
  %s0 = inlined_call_operand.hbm [shape: f32[2,8,32], index: 0, kind: input, shape index: {}]
  %s1 = inlined_call_operand.hbm [shape: f32[32,32], index: 1, kind: input, shape index: {}]
  %s2 = inlined_call_operand.hbm [shape: f32[32,32], index: 2, kind: input, shape index: {}]
  %s3 = inlined_call_operand.hbm [shape: f32[32,32], index: 3, kind: input, shape index: {}]
  %s4 = inlined_call_operand.hbm [shape: f32[32,32], index: 4, kind: input, shape index: {}]
  %s5 = inlined_call_operand.vmem [shape: f32[1,32], index: 5, kind: input, shape index: {}]
  %s6 = inlined_call_operand.vmem [shape: f32[1,32], index: 6, kind: input, shape index: {}]
  %s7 = inlined_call_operand.vmem [shape: f32[1,32], index: 7, kind: input, shape index: {}]
  %s8 = inlined_call_operand.vmem [shape: f32[1,32], index: 8, kind: input, shape index: {}]
  %s9 = inlined_call_operand.hbm [shape: f32[2,8,32], index: 9, kind: output, shape index: {}]
  %s10 = sld [smem:[#allocation0]]
  $region89: #{tpu_custom_call.1} parent=0
    _
  %s12 = ssub.s32 1, %s10
  %s13 = scalar_select 0, %s12, %s10
  $region1: #{tpu_custom_call.1} parent=0
    #allocation2 [shape = 'u8[8192]{0}', space=vmem, size = 0x2000, scoped, tag = 'input window, operand 0']
    #allocation3 [shape = 's32[2]{0}', space=sflag, size = 0x8, scoped, tag = 'scoped memory for tpu_custom_call.1']
    #allocation4 [shape = 's32[2]{0}', space=sflag, size = 0x8, scoped, tag = 'scoped memory for tpu_custom_call.1']
    #allocation5 [shape = 'u8[16384]{0}', space=vmem, size = 0x4000, scoped, tag = 'input window, operand 1, single buffered']
    #allocation6 [shape = 's32[1]{0}', space=sflag, size = 0x4, scoped, tag = 'scoped memory for tpu_custom_call.1']
    #allocation7 [shape = 'u8[16384]{0}', space=vmem, size = 0x4000, scoped, tag = 'input window, operand 2, single buffered']
    #allocation8 [shape = 'u8[16384]{0}', space=vmem, size = 0x4000, scoped, tag = 'input window, operand 3, single buffered']
    #allocation9 [shape = 's32[1]{0}', space=sflag, size = 0x4, scoped, tag = 'scoped memory for tpu_custom_call.1']
    #allocation10 [shape = 'u8[16384]{0}', space=vmem, size = 0x4000, scoped, tag = 'input window, operand 4, single buffered']
    #allocation11 [shape = 'u8[8192]{0}', space=vmem, size = 0x2000, scoped, tag = 'output window, operand 0']
    %14 = vsyncpa [#allocation3], 0
    %s15 = scalar_lea.sflag [#allocation3], 1
    %16 = vsyncpa %s15, 0
    %17 = vsyncpa [#allocation6], 0
    %18 = vsyncpa [#allocation9], 0
    %19 = vsyncpa [#allocation4], 0
    %s20 = scalar_lea.sflag [#allocation4], 1
    %21 = vsyncpa %s20, 0
    loop: start=0, step=1, limit=4
    $region2: #{tpu_custom_call.1} parent=1 // loop_pre_header
      _
    $region3: #{tpu_custom_call.1} parent=1 // loop_header
      %s23 = sphi 0, %s27
      %p24 = scmp.ge.s32.totalorder %s23, 4
      %s33 = sphi 0, %s35
      %s36 = sphi 0, %s33
      %s37 = sphi 0, %s36
      %s53 = sphi 0, %s37
      %s57 = sphi 0, %s57
      %s59 = sphi 0, %s57
      %s60 = sphi 0, %s59
      %s74 = sphi 0, %s60
      %s78 = sphi 0, %s78
      %s80 = sphi 0, %s78
      %s81 = sphi 0, %s80
      %s95 = sphi 0, %s81
      %s99 = sphi 0, %s99
      %s101 = sphi 0, %s99
      %s102 = sphi 0, %s101
      %s116 = sphi 0, %s102
      %s120 = sphi 0, %s120
      %s122 = sphi 0, %s120
      %s123 = sphi 0, %s122
      %s137 = sphi 0, %s123
      %s141 = sphi 0, %s141
      %s143 = sphi 0, %s141
      %s144 = sphi 0, %s143
      %s158 = sphi 0, %s144
      %s162 = sphi 0, %s162
      %s164 = sphi 0, %s162
      %s165 = sphi 0, %s164
      %s179 = sphi 0, %s165
      %s183 = sphi 0, %s183
      %s185 = sphi 0, %s183
      %s186 = sphi 0, %s185
      %s200 = sphi 0, %s186
      %s204 = sphi 0, %s204
      %s206 = sphi 0, %s204
      %s207 = sphi 0, %s206
      %s221 = sphi 0, %s207
      %s227 = sphi 0, %s229
      %s230 = sphi 0, %s227
      %s231 = sphi 0, %s230
      %s247 = sphi 0, %s231
    $region4: #{tpu_custom_call.1} parent=1 // loop_header_branch
      %26 = sbr.rel (%p24) target = $region8
    $region5: #{tpu_custom_call.1} parent=1 // loop_body
      %s28 = ssub.s32 %s23, 1
      %s29 = ssub.s32 %s23, 2
      %s30 = sadd.s32 %s23, 1
      %s31 = ssub.s32 %s23, %s30
      %p32 = scmp.eq.s32.totalorder %s31, 0
      %s34 = sadd.s32 %s33, 1
      %s35 = scalar_select %p32, %s33, %s34
      %p38 = pneg %p32
      %p39 = scmp.eq.s32.totalorder %s23, 1
      %p40 = por %p38, %p39
      %p41 = scmp.ne.s32.totalorder %s33, %s36
      %p42 = scmp.eq.s32.totalorder %s23, 0
      %p43 = por %p41, %p42
      %p44 = scmp.ne.s32.totalorder %s33, %s36
      %p45 = scmp.eq.s32.totalorder %s28, 1
      %p46 = por %p44, %p45
      %p47 = scmp.ne.s32.totalorder %s36, %s37
      %p48 = scmp.eq.s32.totalorder %s28, 0
      %p49 = por %p47, %p48
      %p50 = scmp.ne.s32.totalorder %s36, %s37
      %p51 = scmp.eq.s32.totalorder %s29, 1
      %p52 = por %p50, %p51
      %p54 = scmp.ne.s32.totalorder %s37, %s53
      %p55 = scmp.eq.s32.totalorder %s29, 0
      %p56 = por %p54, %p55
      %s58 = sadd.s32 %s57, 1
      %p61 = scmp.eq.s32.totalorder %s23, 1
      %p62 = scmp.ne.s32.totalorder %s57, %s59
      %p63 = scmp.eq.s32.totalorder %s23, 0
      %p64 = por %p62, %p63
      %p65 = scmp.ne.s32.totalorder %s57, %s59
      %p66 = scmp.eq.s32.totalorder %s28, 1
      %p67 = por %p65, %p66
      %p68 = scmp.ne.s32.totalorder %s59, %s60
      %p69 = scmp.eq.s32.totalorder %s28, 0
      %p70 = por %p68, %p69
      %p71 = scmp.ne.s32.totalorder %s59, %s60
      %p72 = scmp.eq.s32.totalorder %s29, 1
      %p73 = por %p71, %p72
      %p75 = scmp.ne.s32.totalorder %s60, %s74
      %p76 = scmp.eq.s32.totalorder %s29, 0
      %p77 = por %p75, %p76
      %s79 = sadd.s32 %s78, 1
      %p82 = scmp.eq.s32.totalorder %s23, 1
      %p83 = scmp.ne.s32.totalorder %s78, %s80
      %p84 = scmp.eq.s32.totalorder %s23, 0
      %p85 = por %p83, %p84
      %p86 = scmp.ne.s32.totalorder %s78, %s80
      %p87 = scmp.eq.s32.totalorder %s28, 1
      %p88 = por %p86, %p87
      %p89 = scmp.ne.s32.totalorder %s80, %s81
      %p90 = scmp.eq.s32.totalorder %s28, 0
      %p91 = por %p89, %p90
      %p92 = scmp.ne.s32.totalorder %s80, %s81
      %p93 = scmp.eq.s32.totalorder %s29, 1
      %p94 = por %p92, %p93
      %p96 = scmp.ne.s32.totalorder %s81, %s95
      %p97 = scmp.eq.s32.totalorder %s29, 0
      %p98 = por %p96, %p97
      %s100 = sadd.s32 %s99, 1
      %p103 = scmp.eq.s32.totalorder %s23, 1
      %p104 = scmp.ne.s32.totalorder %s99, %s101
      %p105 = scmp.eq.s32.totalorder %s23, 0
      %p106 = por %p104, %p105
      %p107 = scmp.ne.s32.totalorder %s99, %s101
      %p108 = scmp.eq.s32.totalorder %s28, 1
      %p109 = por %p107, %p108
      %p110 = scmp.ne.s32.totalorder %s101, %s102
      %p111 = scmp.eq.s32.totalorder %s28, 0
      %p112 = por %p110, %p111
      %p113 = scmp.ne.s32.totalorder %s101, %s102
      %p114 = scmp.eq.s32.totalorder %s29, 1
      %p115 = por %p113, %p114
      %p117 = scmp.ne.s32.totalorder %s102, %s116
      %p118 = scmp.eq.s32.totalorder %s29, 0
      %p119 = por %p117, %p118
      %s121 = sadd.s32 %s120, 1
      %p124 = scmp.eq.s32.totalorder %s23, 1
      %p125 = scmp.ne.s32.totalorder %s120, %s122
      %p126 = scmp.eq.s32.totalorder %s23, 0
      %p127 = por %p125, %p126
      %p128 = scmp.ne.s32.totalorder %s120, %s122
      %p129 = scmp.eq.s32.totalorder %s28, 1
      %p130 = por %p128, %p129
      %p131 = scmp.ne.s32.totalorder %s122, %s123
      %p132 = scmp.eq.s32.totalorder %s28, 0
      %p133 = por %p131, %p132
      %p134 = scmp.ne.s32.totalorder %s122, %s123
      %p135 = scmp.eq.s32.totalorder %s29, 1
      %p136 = por %p134, %p135
      %p138 = scmp.ne.s32.totalorder %s123, %s137
      %p139 = scmp.eq.s32.totalorder %s29, 0
      %p140 = por %p138, %p139
      %s142 = sadd.s32 %s141, 1
      %p145 = scmp.eq.s32.totalorder %s23, 1
      %p146 = scmp.ne.s32.totalorder %s141, %s143
      %p147 = scmp.eq.s32.totalorder %s23, 0
      %p148 = por %p146, %p147
      %p149 = scmp.ne.s32.totalorder %s141, %s143
      %p150 = scmp.eq.s32.totalorder %s28, 1
      %p151 = por %p149, %p150
      %p152 = scmp.ne.s32.totalorder %s143, %s144
      %p153 = scmp.eq.s32.totalorder %s28, 0
      %p154 = por %p152, %p153
      %p155 = scmp.ne.s32.totalorder %s143, %s144
      %p156 = scmp.eq.s32.totalorder %s29, 1
      %p157 = por %p155, %p156
      %p159 = scmp.ne.s32.totalorder %s144, %s158
      %p160 = scmp.eq.s32.totalorder %s29, 0
      %p161 = por %p159, %p160
      %s163 = sadd.s32 %s162, 1
      %p166 = scmp.eq.s32.totalorder %s23, 1
      %p167 = scmp.ne.s32.totalorder %s162, %s164
      %p168 = scmp.eq.s32.totalorder %s23, 0
      %p169 = por %p167, %p168
      %p170 = scmp.ne.s32.totalorder %s162, %s164
      %p171 = scmp.eq.s32.totalorder %s28, 1
      %p172 = por %p170, %p171
      %p173 = scmp.ne.s32.totalorder %s164, %s165
      %p174 = scmp.eq.s32.totalorder %s28, 0
      %p175 = por %p173, %p174
      %p176 = scmp.ne.s32.totalorder %s164, %s165
      %p177 = scmp.eq.s32.totalorder %s29, 1
      %p178 = por %p176, %p177
      %p180 = scmp.ne.s32.totalorder %s165, %s179
      %p181 = scmp.eq.s32.totalorder %s29, 0
      %p182 = por %p180, %p181
      %s184 = sadd.s32 %s183, 1
      %p187 = scmp.eq.s32.totalorder %s23, 1
      %p188 = scmp.ne.s32.totalorder %s183, %s185
      %p189 = scmp.eq.s32.totalorder %s23, 0
      %p190 = por %p188, %p189
      %p191 = scmp.ne.s32.totalorder %s183, %s185
      %p192 = scmp.eq.s32.totalorder %s28, 1
      %p193 = por %p191, %p192
      %p194 = scmp.ne.s32.totalorder %s185, %s186
      %p195 = scmp.eq.s32.totalorder %s28, 0
      %p196 = por %p194, %p195
      %p197 = scmp.ne.s32.totalorder %s185, %s186
      %p198 = scmp.eq.s32.totalorder %s29, 1
      %p199 = por %p197, %p198
      %p201 = scmp.ne.s32.totalorder %s186, %s200
      %p202 = scmp.eq.s32.totalorder %s29, 0
      %p203 = por %p201, %p202
      %s205 = sadd.s32 %s204, 1
      %p208 = scmp.eq.s32.totalorder %s23, 1
      %p209 = scmp.ne.s32.totalorder %s204, %s206
      %p210 = scmp.eq.s32.totalorder %s23, 0
      %p211 = por %p209, %p210
      %p212 = scmp.ne.s32.totalorder %s204, %s206
      %p213 = scmp.eq.s32.totalorder %s28, 1
      %p214 = por %p212, %p213
      %p215 = scmp.ne.s32.totalorder %s206, %s207
      %p216 = scmp.eq.s32.totalorder %s28, 0
      %p217 = por %p215, %p216
      %p218 = scmp.ne.s32.totalorder %s206, %s207
      %p219 = scmp.eq.s32.totalorder %s29, 1
      %p220 = por %p218, %p219
      %p222 = scmp.ne.s32.totalorder %s207, %s221
      %p223 = scmp.eq.s32.totalorder %s29, 0
      %p224 = por %p222, %p223
      %s225 = ssub.s32 %s23, %s30
      %p226 = scmp.eq.s32.totalorder %s225, 0
      %s228 = sadd.s32 %s227, 1
      %s229 = scalar_select %p226, %s227, %s228
      %p232 = pneg %p226
      %p233 = scmp.eq.s32.totalorder %s23, 1
      %p234 = por %p232, %p233
      %p235 = scmp.ne.s32.totalorder %s227, %s230
      %p236 = scmp.eq.s32.totalorder %s23, 0
      %p237 = por %p235, %p236
      %p238 = scmp.ne.s32.totalorder %s227, %s230
      %p239 = scmp.eq.s32.totalorder %s28, 1
      %p240 = por %p238, %p239
      %p241 = scmp.ne.s32.totalorder %s230, %s231
      %p242 = scmp.eq.s32.totalorder %s28, 0
      %p243 = por %p241, %p242
      %p244 = scmp.ne.s32.totalorder %s230, %s231
      %p245 = scmp.eq.s32.totalorder %s29, 1
      %p246 = por %p244, %p245
      %p248 = scmp.ne.s32.totalorder %s231, %s247
      %p249 = scmp.eq.s32.totalorder %s29, 0
      %p250 = por %p248, %p249
      %p251 = scmp.le.s32.totalorder 1, %s23
      %p252 = scmp.lt.s32.totalorder %s23, 3
      %p253 = pnand %p251, %p252
      %p254 = pneg %p253
      // Predicated region
      $region9: #{tpu_custom_call.1} parent=5 // pred_check
        _
      $region10: #{tpu_custom_call.1} parent=5 // pred_check_branch
        %256 = sbr.rel (%p253) target = $region12
      $region11: #{tpu_custom_call.1} parent=5 // pred_region
        %s257 = ssub.s32 %s23, 1
        // Predicated region
        $region13: #{tpu_custom_call.1} parent=11 // pred_check
          %p258 = pneg %p70
        $region14: #{tpu_custom_call.1} parent=11 // pred_check_branch
          %260 = sbr.rel (%p258) target = $region16
        $region15: #{tpu_custom_call.1} parent=11 // pred_region
          %s262 = ssub.s32 512, 512
          %263 = vsyncadd [#allocation6], %s262
          %s264 = sshll.u32 [#allocation5], 4
          %s265 = int_to_ptr.vmem [resolvable:$true] %s264
          %270 = dma.hbm_to_vmem [thread:$0]  %s1, 512, %s265, [#allocation6], 128, 128, 8
        $region16: #{tpu_custom_call.1} parent=11 // pred_fallthru
          _
        // Predicated region
        $region17: #{tpu_custom_call.1} parent=11 // pred_check
          %p271 = pneg %p91
        $region18: #{tpu_custom_call.1} parent=11 // pred_check_branch
          %273 = sbr.rel (%p271) target = $region20
        $region19: #{tpu_custom_call.1} parent=11 // pred_region
          %s275 = ssub.s32 512, 512
          %276 = vsyncadd [#allocation6], %s275
          %s277 = sshll.u32 [#allocation7], 4
          %s278 = int_to_ptr.vmem [resolvable:$true] %s277
          %283 = dma.hbm_to_vmem [thread:$0]  %s2, 512, %s278, [#allocation6], 128, 128, 8
        $region20: #{tpu_custom_call.1} parent=11 // pred_fallthru
          _
        // Predicated region
        $region21: #{tpu_custom_call.1} parent=11 // pred_check
          %p284 = pneg %p112
        $region22: #{tpu_custom_call.1} parent=11 // pred_check_branch
          %286 = sbr.rel (%p284) target = $region24
        $region23: #{tpu_custom_call.1} parent=11 // pred_region
          %s288 = ssub.s32 512, 512
          %289 = vsyncadd [#allocation9], %s288
          %s290 = sshll.u32 [#allocation8], 4
          %s291 = int_to_ptr.vmem [resolvable:$true] %s290
          %296 = dma.hbm_to_vmem [thread:$0]  %s3, 512, %s291, [#allocation9], 128, 128, 8
        $region24: #{tpu_custom_call.1} parent=11 // pred_fallthru
          _
        // Predicated region
        $region25: #{tpu_custom_call.1} parent=11 // pred_check
          %p297 = pneg %p133
        $region26: #{tpu_custom_call.1} parent=11 // pred_check_branch
          %299 = sbr.rel (%p297) target = $region28
        $region27: #{tpu_custom_call.1} parent=11 // pred_region
          %s301 = ssub.s32 512, 512
          %302 = vsyncadd [#allocation9], %s301
          %s303 = sshll.u32 [#allocation10], 4
          %s304 = int_to_ptr.vmem [resolvable:$true] %s303
          %309 = dma.hbm_to_vmem [thread:$0]  %s4, 512, %s304, [#allocation9], 128, 128, 8
        $region28: #{tpu_custom_call.1} parent=11 // pred_fallthru
          _
        // Predicated region
        $region29: #{tpu_custom_call.1} parent=11 // pred_check
          %p310 = pneg %p154
        $region30: #{tpu_custom_call.1} parent=11 // pred_check_branch
          %312 = sbr.rel (%p310) target = $region32
        $region31: #{tpu_custom_call.1} parent=11 // pred_region
          _
        $region32: #{tpu_custom_call.1} parent=11 // pred_fallthru
          _
        // Predicated region
        $region33: #{tpu_custom_call.1} parent=11 // pred_check
          %p313 = pneg %p175
        $region34: #{tpu_custom_call.1} parent=11 // pred_check_branch
          %315 = sbr.rel (%p313) target = $region36
        $region35: #{tpu_custom_call.1} parent=11 // pred_region
          _
        $region36: #{tpu_custom_call.1} parent=11 // pred_fallthru
          _
        // Predicated region
        $region37: #{tpu_custom_call.1} parent=11 // pred_check
          %p316 = pneg %p196
        $region38: #{tpu_custom_call.1} parent=11 // pred_check_branch
          %318 = sbr.rel (%p316) target = $region40
        $region39: #{tpu_custom_call.1} parent=11 // pred_region
          _
        $region40: #{tpu_custom_call.1} parent=11 // pred_fallthru
          _
        // Predicated region
        $region41: #{tpu_custom_call.1} parent=11 // pred_check
          %p319 = pneg %p217
        $region42: #{tpu_custom_call.1} parent=11 // pred_check_branch
          %321 = sbr.rel (%p319) target = $region44
        $region43: #{tpu_custom_call.1} parent=11 // pred_region
          _
        $region44: #{tpu_custom_call.1} parent=11 // pred_fallthru
          _
      $region12: #{tpu_custom_call.1} parent=5 // pred_fallthru
        _
      %p322 = scmp.lt.s32.totalorder %s23, 2
      // Predicated region
      $region45: #{tpu_custom_call.1} parent=5 // pred_check
        %p323 = pneg %p322
      $region46: #{tpu_custom_call.1} parent=5 // pred_check_branch
        %325 = sbr.rel (%p323) target = $region48
      $region47: #{tpu_custom_call.1} parent=5 // pred_region
        // Predicated region
        $region49: #{tpu_custom_call.1} parent=47 // pred_check
          %p326 = pneg %p43
        $region50: #{tpu_custom_call.1} parent=47 // pred_check_branch
          %328 = sbr.rel (%p326) target = $region52
        $region51: #{tpu_custom_call.1} parent=47 // pred_region
          %s329 = sand.u32 %s33, 1
          %s330 = scalar_lea.sflag [#allocation3], %s329
          %s331 = sand.u32 %s33, 1
          %s332 = smul.addr %s331, 8
          %s333 = scalar_lea.vmem [#allocation2], %s332
          %s335 = ssub.s32 128, 128
          %336 = vsyncadd %s330, %s335
          %s337 = smul.addr %s23, 128
          %s338 = scalar_lea.hbm %s0, %s337
          %s340 = sshll.u32 %s333, 4
          %s341 = int_to_ptr.vmem [resolvable:$true] %s340
          %343 = dma.hbm_to_vmem [thread:$0]  %s338, 128, %s341, %s330
        $region52: #{tpu_custom_call.1} parent=47 // pred_fallthru
          _
      $region48: #{tpu_custom_call.1} parent=5 // pred_fallthru
        _
      %p344 = scmp.le.s32.totalorder 1, %s23
      %p345 = scmp.lt.s32.totalorder %s23, 3
      %p346 = pnand %p344, %p345
      %p347 = pneg %p346
      // Predicated region
      $region53: #{tpu_custom_call.1} parent=5 // pred_check
        _
      $region54: #{tpu_custom_call.1} parent=5 // pred_check_branch
        %349 = sbr.rel (%p346) target = $region56
      $region55: #{tpu_custom_call.1} parent=5 // pred_region
        %s350 = ssub.s32 %s23, 1
        %s351 = sand.u32 %s36, 1
        %s352 = scalar_lea.sflag [#allocation3], %s351
        %s353 = sand.u32 %s36, 1
        %s354 = smul.addr %s353, 8
        %s355 = scalar_lea.vmem [#allocation2], %s354
        // Predicated region
        $region57: #{tpu_custom_call.1} parent=55 // pred_check
          %p356 = pneg %p49
        $region58: #{tpu_custom_call.1} parent=55 // pred_check_branch
          %358 = sbr.rel (%p356) target = $region60
        $region59: #{tpu_custom_call.1} parent=55 // pred_region
          %359 = dma.done %s352, 128
        $region60: #{tpu_custom_call.1} parent=55 // pred_fallthru
          _
        // Predicated region
        $region61: #{tpu_custom_call.1} parent=55 // pred_check
          %p360 = pneg %p70
        $region62: #{tpu_custom_call.1} parent=55 // pred_check_branch
          %362 = sbr.rel (%p360) target = $region64
        $region63: #{tpu_custom_call.1} parent=55 // pred_region
          %363 = dma.done [#allocation6], 512
        $region64: #{tpu_custom_call.1} parent=55 // pred_fallthru
          _
        // Predicated region
        $region65: #{tpu_custom_call.1} parent=55 // pred_check
          %p364 = pneg %p91
        $region66: #{tpu_custom_call.1} parent=55 // pred_check_branch
          %366 = sbr.rel (%p364) target = $region68
        $region67: #{tpu_custom_call.1} parent=55 // pred_region
          %367 = dma.done [#allocation6], 512
        $region68: #{tpu_custom_call.1} parent=55 // pred_fallthru
          _
        // Predicated region
        $region69: #{tpu_custom_call.1} parent=55 // pred_check
          %p368 = pneg %p112
        $region70: #{tpu_custom_call.1} parent=55 // pred_check_branch
          %370 = sbr.rel (%p368) target = $region72
        $region71: #{tpu_custom_call.1} parent=55 // pred_region
          %371 = dma.done [#allocation9], 512
        $region72: #{tpu_custom_call.1} parent=55 // pred_fallthru
          _
        // Predicated region
        $region73: #{tpu_custom_call.1} parent=55 // pred_check
          %p372 = pneg %p133
        $region74: #{tpu_custom_call.1} parent=55 // pred_check_branch
          %374 = sbr.rel (%p372) target = $region76
        $region75: #{tpu_custom_call.1} parent=55 // pred_region
          %375 = dma.done [#allocation9], 512
        $region76: #{tpu_custom_call.1} parent=55 // pred_fallthru
          _
        %s376 = sand.u32 %s36, 1
        %s377 = scalar_lea.sflag [#allocation3], %s376
        %s378 = sand.u32 %s36, 1
        %s379 = smul.addr %s378, 8
        %s380 = scalar_lea.vmem [#allocation2], %s379
        %p381 = pneg %p49
        %p382 = pneg %p46
        %p383 = pneg %p70
        %p384 = pneg %p67
        %p385 = pneg %p91
        %p386 = pneg %p88
        %p387 = pneg %p112
        %p388 = pneg %p109
        %p389 = pneg %p133
        %p390 = pneg %p130
        %p391 = pneg %p154
        %p392 = pneg %p151
        %p393 = pneg %p175
        %p394 = pneg %p172
        %p395 = pneg %p196
        %p396 = pneg %p193
        %p397 = pneg %p217
        %p398 = pneg %p214
        %p399 = pneg %p243
        %p400 = pneg %p240
        %s401 = sand.u32 %s230, 1
        %s402 = scalar_lea.sflag [#allocation4], %s401
        %s403 = sand.u32 %s230, 1
        %s404 = smul.addr %s403, 8
        %s405 = scalar_lea.vmem [#allocation11], %s404
        %v406 = vld [vmem:[%s355] sm:$0xff]
        %v407 = vld [vmem:[#allocation5] sm:$0xff]
        %v408 = vld [vmem:[#allocation5 + $0x8] sm:$0xff]
        %v409 = vld [vmem:[#allocation5 + $0x10] sm:$0xff]
        %v410 = vld [vmem:[#allocation5 + $0x18] sm:$0xff]
        %v411 = vld [vmem:[%s5] sm:$0x1]
        %v413 = vlaneseq
        %v414 = vshrl.u32 %v413, 7
        %v415 = vsub.s32 0, %v414
        %v416 = vrot.slane %v411, %v415
        %vm418 = vcmask 261120
        %v420 = vsel %vm418, %v406, 0
        %422 = vmatprep.subr.mxu0 0.0
        %423 = vmatpush1.msra.mxu0 %v407
        %424 = vmatprep.subr.mxu0 0.0
        %425 = vmatpush1.msra.mxu0 %v408
        %426 = vmatprep.subr.mxu0 0.0
        %427 = vmatpush1.msra.mxu0 %v409
        %428 = vmatprep.subr.mxu0 0.0
        %429 = vmatpush1.msra.mxu0 %v410
        %430 = vmatprep.subr.mxu0 0.0
        %431 = vmatpush1.msra.mxu0 0.0
        %432 = vmatprep.subr.mxu0 0.0
        %433 = vmatpush1.msra.mxu0 0.0
        %434 = vmatprep.subr.mxu0 0.0
        %435 = vmatpush1.msra.mxu0 0.0
        %436 = vmatprep.subr.mxu0 0.0
        %437 = vmatpush1.msra.mxu0 0.0
        %438 = vmatprep.subr.mxu0 0.0
        %439 = vmatpush1.msra.mxu0 0.0
        %440 = vmatprep.subr.mxu0 0.0
        %441 = vmatpush1.msra.mxu0 0.0
        %442 = vmatprep.subr.mxu0 0.0
        %443 = vmatpush1.msra.mxu0 0.0
        %444 = vmatprep.subr.mxu0 0.0
        %445 = vmatpush1.msra.mxu0 0.0
        %446 = vmatprep.subr.mxu0 0.0
        %447 = vmatpush1.msra.mxu0 0.0
        %448 = vmatprep.subr.mxu0 0.0
        %449 = vmatpush1.msra.mxu0 0.0
        %450 = vmatprep.subr.mxu0 0.0
        %451 = vmatpush1.msra.mxu0 0.0
        %452 = vmatprep.subr.mxu0 0.0
        %453 = vmatpush1.msra.mxu0 0.0
        %454 = vmatprep.subr.mxu0 0.0
        %455 = vmatpush1.msra.mxu0 0.0
        %456 = vmatprep.subr.mxu0 0.0
        %457 = vmatpush1.msra.mxu0 0.0
        %458 = vmatprep.subr.mxu0 0.0
        %459 = vmatpush1.msra.mxu0 0.0
        %460 = vmatprep.subr.mxu0 0.0
        %461 = vmatpush1.msra.mxu0 0.0
        %462 = vmatprep.subr.mxu0 0.0
        %463 = vmatpush1.msra.mxu0 0.0
        %464 = vmatprep.subr.mxu0 0.0
        %465 = vmatpush1.msra.mxu0 0.0
        %466 = vmatprep.subr.mxu0 0.0
        %467 = vmatpush1.msra.mxu0 0.0
        %468 = vmatprep.subr.mxu0 0.0
        %469 = vmatpush1.msra.mxu0 0.0
        %470 = vmatprep.subr.mxu0 0.0
        %471 = vmatpush1.msra.mxu0 0.0
        %472 = vmatprep.subr.mxu0 0.0
        %473 = vmatpush1.msra.mxu0 0.0
        %474 = vmatprep.subr.mxu0 0.0
        %475 = vmatpush1.msra.mxu0 0.0
        %476 = vmatprep.subr.mxu0 0.0
        %477 = vmatpush1.msra.mxu0 0.0
        %478 = vmatprep.subr.mxu0 0.0
        %479 = vmatpush1.msra.mxu0 0.0
        %480 = vmatprep.subr.mxu0 0.0
        %481 = vmatpush1.msra.mxu0 0.0
        %482 = vmatprep.subr.mxu0 0.0
        %483 = vmatpush1.msra.mxu0 0.0
        %484 = vmatprep.subr.mxu0 0.0
        %485 = vmatpush1.msra.mxu0 0.0
        %486 = vmatprep.mubr.f32.mxu0 0.0
        %487 = vmatmul.mubr.f32.gmra.mrb[0].mxu0 %v420
        %v488 = vpop.f32.mrb[0].mxu0
        %v489 = vadd.f32 %v416, %v488
        %v490 = vpop.f32.mrb[0].mxu0
        %491 = vdwg.mxu0
        %v492 = vmul.f32 %v489, 0.35355338
        %v493 = vld [vmem:[#allocation7] sm:$0xff]
        %v494 = vld [vmem:[#allocation7 + $0x8] sm:$0xff]
        %v495 = vld [vmem:[#allocation7 + $0x10] sm:$0xff]
        %v496 = vld [vmem:[#allocation7 + $0x18] sm:$0xff]
        %v497 = vld [vmem:[%s6] sm:$0x1]
        %v499 = vlaneseq
        %v500 = vshrl.u32 %v499, 7
        %v501 = vsub.s32 0, %v500
        %v502 = vrot.slane %v497, %v501
        %504 = vmatprep.subr.mxu0 0.0
        %505 = vmatpush1.msra.mxu0 %v493
        %506 = vmatprep.subr.mxu0 0.0
        %507 = vmatpush1.msra.mxu0 %v494
        %508 = vmatprep.subr.mxu0 0.0
        %509 = vmatpush1.msra.mxu0 %v495
        %510 = vmatprep.subr.mxu0 0.0
        %511 = vmatpush1.msra.mxu0 %v496
        %512 = vmatprep.subr.mxu0 0.0
        %513 = vmatpush1.msra.mxu0 0.0
        %514 = vmatprep.subr.mxu0 0.0
        %515 = vmatpush1.msra.mxu0 0.0
        %516 = vmatprep.subr.mxu0 0.0
        %517 = vmatpush1.msra.mxu0 0.0
        %518 = vmatprep.subr.mxu0 0.0
        %519 = vmatpush1.msra.mxu0 0.0
        %520 = vmatprep.subr.mxu0 0.0
        %521 = vmatpush1.msra.mxu0 0.0
        %522 = vmatprep.subr.mxu0 0.0
        %523 = vmatpush1.msra.mxu0 0.0
        %524 = vmatprep.subr.mxu0 0.0
        %525 = vmatpush1.msra.mxu0 0.0
        %526 = vmatprep.subr.mxu0 0.0
        %527 = vmatpush1.msra.mxu0 0.0
        %528 = vmatprep.subr.mxu0 0.0
        %529 = vmatpush1.msra.mxu0 0.0
        %530 = vmatprep.subr.mxu0 0.0
        %531 = vmatpush1.msra.mxu0 0.0
        %532 = vmatprep.subr.mxu0 0.0
        %533 = vmatpush1.msra.mxu0 0.0
        %534 = vmatprep.subr.mxu0 0.0
        %535 = vmatpush1.msra.mxu0 0.0
        %536 = vmatprep.subr.mxu0 0.0
        %537 = vmatpush1.msra.mxu0 0.0
        %538 = vmatprep.subr.mxu0 0.0
        %539 = vmatpush1.msra.mxu0 0.0
        %540 = vmatprep.subr.mxu0 0.0
        %541 = vmatpush1.msra.mxu0 0.0
        %542 = vmatprep.subr.mxu0 0.0
        %543 = vmatpush1.msra.mxu0 0.0
        %544 = vmatprep.subr.mxu0 0.0
        %545 = vmatpush1.msra.mxu0 0.0
        %546 = vmatprep.subr.mxu0 0.0
        %547 = vmatpush1.msra.mxu0 0.0
        %548 = vmatprep.subr.mxu0 0.0
        %549 = vmatpush1.msra.mxu0 0.0
        %550 = vmatprep.subr.mxu0 0.0
        %551 = vmatpush1.msra.mxu0 0.0
        %552 = vmatprep.subr.mxu0 0.0
        %553 = vmatpush1.msra.mxu0 0.0
        %554 = vmatprep.subr.mxu0 0.0
        %555 = vmatpush1.msra.mxu0 0.0
        %556 = vmatprep.subr.mxu0 0.0
        %557 = vmatpush1.msra.mxu0 0.0
        %558 = vmatprep.subr.mxu0 0.0
        %559 = vmatpush1.msra.mxu0 0.0
        %560 = vmatprep.subr.mxu0 0.0
        %561 = vmatpush1.msra.mxu0 0.0
        %562 = vmatprep.subr.mxu0 0.0
        %563 = vmatpush1.msra.mxu0 0.0
        %564 = vmatprep.subr.mxu0 0.0
        %565 = vmatpush1.msra.mxu0 0.0
        %566 = vmatprep.subr.mxu0 0.0
        %567 = vmatpush1.msra.mxu0 0.0
        %568 = vmatprep.mubr.f32.mxu0 0.0
        %569 = vmatmul.mubr.f32.gmra.mrb[0].mxu0 %v420
        %v570 = vpop.f32.mrb[0].mxu0
        %v571 = vadd.f32 %v502, %v570
        %v572 = vpop.f32.mrb[0].mxu0
        %573 = vdwg.mxu0
        %v574 = vld [vmem:[#allocation8] sm:$0xff]
        %v575 = vld [vmem:[#allocation8 + $0x8] sm:$0xff]
        %v576 = vld [vmem:[#allocation8 + $0x10] sm:$0xff]
        %v577 = vld [vmem:[#allocation8 + $0x18] sm:$0xff]
        %v578 = vld [vmem:[%s7] sm:$0x1]
        %v580 = vlaneseq
        %v581 = vshrl.u32 %v580, 7
        %v582 = vsub.s32 0, %v581
        %v583 = vrot.slane %v578, %v582
        %585 = vmatprep.subr.mxu0 0.0
        %586 = vmatpush1.msra.mxu0 %v574
        %587 = vmatprep.subr.mxu0 0.0
        %588 = vmatpush1.msra.mxu0 %v575
        %589 = vmatprep.subr.mxu0 0.0
        %590 = vmatpush1.msra.mxu0 %v576
        %591 = vmatprep.subr.mxu0 0.0
        %592 = vmatpush1.msra.mxu0 %v577
        %593 = vmatprep.subr.mxu0 0.0
        %594 = vmatpush1.msra.mxu0 0.0
        %595 = vmatprep.subr.mxu0 0.0
        %596 = vmatpush1.msra.mxu0 0.0
        %597 = vmatprep.subr.mxu0 0.0
        %598 = vmatpush1.msra.mxu0 0.0
        %599 = vmatprep.subr.mxu0 0.0
        %600 = vmatpush1.msra.mxu0 0.0
        %601 = vmatprep.subr.mxu0 0.0
        %602 = vmatpush1.msra.mxu0 0.0
        %603 = vmatprep.subr.mxu0 0.0
        %604 = vmatpush1.msra.mxu0 0.0
        %605 = vmatprep.subr.mxu0 0.0
        %606 = vmatpush1.msra.mxu0 0.0
        %607 = vmatprep.subr.mxu0 0.0
        %608 = vmatpush1.msra.mxu0 0.0
        %609 = vmatprep.subr.mxu0 0.0
        %610 = vmatpush1.msra.mxu0 0.0
        %611 = vmatprep.subr.mxu0 0.0
        %612 = vmatpush1.msra.mxu0 0.0
        %613 = vmatprep.subr.mxu0 0.0
        %614 = vmatpush1.msra.mxu0 0.0
        %615 = vmatprep.subr.mxu0 0.0
        %616 = vmatpush1.msra.mxu0 0.0
        %617 = vmatprep.subr.mxu0 0.0
        %618 = vmatpush1.msra.mxu0 0.0
        %619 = vmatprep.subr.mxu0 0.0
        %620 = vmatpush1.msra.mxu0 0.0
        %621 = vmatprep.subr.mxu0 0.0
        %622 = vmatpush1.msra.mxu0 0.0
        %623 = vmatprep.subr.mxu0 0.0
        %624 = vmatpush1.msra.mxu0 0.0
        %625 = vmatprep.subr.mxu0 0.0
        %626 = vmatpush1.msra.mxu0 0.0
        %627 = vmatprep.subr.mxu0 0.0
        %628 = vmatpush1.msra.mxu0 0.0
        %629 = vmatprep.subr.mxu0 0.0
        %630 = vmatpush1.msra.mxu0 0.0
        %631 = vmatprep.subr.mxu0 0.0
        %632 = vmatpush1.msra.mxu0 0.0
        %633 = vmatprep.subr.mxu0 0.0
        %634 = vmatpush1.msra.mxu0 0.0
        %635 = vmatprep.subr.mxu0 0.0
        %636 = vmatpush1.msra.mxu0 0.0
        %637 = vmatprep.subr.mxu0 0.0
        %638 = vmatpush1.msra.mxu0 0.0
        %639 = vmatprep.subr.mxu0 0.0
        %640 = vmatpush1.msra.mxu0 0.0
        %641 = vmatprep.subr.mxu0 0.0
        %642 = vmatpush1.msra.mxu0 0.0
        %643 = vmatprep.subr.mxu0 0.0
        %644 = vmatpush1.msra.mxu0 0.0
        %645 = vmatprep.subr.mxu0 0.0
        %646 = vmatpush1.msra.mxu0 0.0
        %647 = vmatprep.subr.mxu0 0.0
        %648 = vmatpush1.msra.mxu0 0.0
        %649 = vmatprep.mubr.f32.mxu0 0.0
        %650 = vmatmul.mubr.f32.gmra.mrb[0].mxu0 %v420
        %v651 = vpop.f32.mrb[0].mxu0
        %v652 = vadd.f32 %v583, %v651
        %v653 = vpop.f32.mrb[0].mxu0
        %654 = vdwg.mxu0
        %v655 = vld [vmem:[%s8] sm:$0x1]
        %v657 = vlaneseq
        %v658 = vshrl.u32 %v657, 7
        %v659 = vsub.s32 0, %v658
        %v660 = vrot.slane %v655, %v659
        %vm662 = vcmask 64512
        %v664 = vsel %vm662, %v492, 0
        %v667 = vsel %vm662, %v571, 0
        %669 = vmatprep.subr.mxu0 0.0
        %670 = vmatpush1.xpose.msra.mxu0 %v667
        %671 = vmatprep.subr.mxu0 0.0
        %672 = vmatpush1.xpose.msra.mxu0 0.0
        %673 = vmatprep.subr.mxu0 0.0
        %674 = vmatpush1.xpose.msra.mxu0 0.0
        %675 = vmatprep.subr.mxu0 0.0
        %676 = vmatpush1.xpose.msra.mxu0 0.0
        %677 = vmatprep.subr.mxu0 0.0
        %678 = vmatpush1.xpose.msra.mxu0 0.0
        %679 = vmatprep.subr.mxu0 0.0
        %680 = vmatpush1.xpose.msra.mxu0 0.0
        %681 = vmatprep.subr.mxu0 0.0
        %682 = vmatpush1.xpose.msra.mxu0 0.0
        %683 = vmatprep.subr.mxu0 0.0
        %684 = vmatpush1.xpose.msra.mxu0 0.0
        %685 = vmatprep.subr.mxu0 0.0
        %686 = vmatpush1.xpose.msra.mxu0 0.0
        %687 = vmatprep.subr.mxu0 0.0
        %688 = vmatpush1.xpose.msra.mxu0 0.0
        %689 = vmatprep.subr.mxu0 0.0
        %690 = vmatpush1.xpose.msra.mxu0 0.0
        %691 = vmatprep.subr.mxu0 0.0
        %692 = vmatpush1.xpose.msra.mxu0 0.0
        %693 = vmatprep.subr.mxu0 0.0
        %694 = vmatpush1.xpose.msra.mxu0 0.0
        %695 = vmatprep.subr.mxu0 0.0
        %696 = vmatpush1.xpose.msra.mxu0 0.0
        %697 = vmatprep.subr.mxu0 0.0
        %698 = vmatpush1.xpose.msra.mxu0 0.0
        %699 = vmatprep.subr.mxu0 0.0
        %700 = vmatpush1.xpose.msra.mxu0 0.0
        %701 = vmatprep.subr.mxu0 0.0
        %702 = vmatpush1.xpose.msra.mxu0 0.0
        %703 = vmatprep.subr.mxu0 0.0
        %704 = vmatpush1.xpose.msra.mxu0 0.0
        %705 = vmatprep.subr.mxu0 0.0
        %706 = vmatpush1.xpose.msra.mxu0 0.0
        %707 = vmatprep.subr.mxu0 0.0
        %708 = vmatpush1.xpose.msra.mxu0 0.0
        %709 = vmatprep.subr.mxu0 0.0
        %710 = vmatpush1.xpose.msra.mxu0 0.0
        %711 = vmatprep.subr.mxu0 0.0
        %712 = vmatpush1.xpose.msra.mxu0 0.0
        %713 = vmatprep.subr.mxu0 0.0
        %714 = vmatpush1.xpose.msra.mxu0 0.0
        %715 = vmatprep.subr.mxu0 0.0
        %716 = vmatpush1.xpose.msra.mxu0 0.0
        %717 = vmatprep.subr.mxu0 0.0
        %718 = vmatpush1.xpose.msra.mxu0 0.0
        %719 = vmatprep.subr.mxu0 0.0
        %720 = vmatpush1.xpose.msra.mxu0 0.0
        %721 = vmatprep.subr.mxu0 0.0
        %722 = vmatpush1.xpose.msra.mxu0 0.0
        %723 = vmatprep.subr.mxu0 0.0
        %724 = vmatpush1.xpose.msra.mxu0 0.0
        %725 = vmatprep.subr.mxu0 0.0
        %726 = vmatpush1.xpose.msra.mxu0 0.0
        %727 = vmatprep.subr.mxu0 0.0
        %728 = vmatpush1.xpose.msra.mxu0 0.0
        %729 = vmatprep.subr.mxu0 0.0
        %730 = vmatpush1.xpose.msra.mxu0 0.0
        %731 = vmatprep.subr.mxu0 0.0
        %732 = vmatpush1.xpose.msra.mxu0 0.0
        %733 = vmatprep.mubr.f32.mxu0 0.0
        %734 = vmatmul.mubr.f32.gmra.mrb[0].mxu0 %v664
        %v735 = vpop.f32.mrb[0].mxu0
        %v736 = vadd.f32 0.0, %v735
        %v737 = vpop.f32.mrb[0].mxu0
        %738 = vdwg.mxu0
        %v739 = vsel %vm662, %v736, -inf
        %740 = vmax.xlane.f32.xlu0 %v739
        %v741 = vpop.xlane.xlu0 %740
        %v742 = vsub.f32 %v736, %v741
        %v743 = vmul.f32 %v742, 1.442695
        %v744 = vpow.pop %v743
        %v745 = vsel %vm662, %v744, 0.0
        %746 = vadd.xlane.f32.xlu0 %v745
        %v747 = vpop.xlane.xlu0 %746
        %v749 = vsel %vm662, %v744, 0
        %751 = vmatprep.subr.mxu0 0.0
        %752 = vmatpush1.msra.mxu0 %v652
        %753 = vmatprep.subr.mxu0 0.0
        %754 = vmatpush1.msra.mxu0 0.0
        %755 = vmatprep.subr.mxu0 0.0
        %756 = vmatpush1.msra.mxu0 0.0
        %757 = vmatprep.subr.mxu0 0.0
        %758 = vmatpush1.msra.mxu0 0.0
        %759 = vmatprep.subr.mxu0 0.0
        %760 = vmatpush1.msra.mxu0 0.0
        %761 = vmatprep.subr.mxu0 0.0
        %762 = vmatpush1.msra.mxu0 0.0
        %763 = vmatprep.subr.mxu0 0.0
        %764 = vmatpush1.msra.mxu0 0.0
        %765 = vmatprep.subr.mxu0 0.0
        %766 = vmatpush1.msra.mxu0 0.0
        %767 = vmatprep.subr.mxu0 0.0
        %768 = vmatpush1.msra.mxu0 0.0
        %769 = vmatprep.subr.mxu0 0.0
        %770 = vmatpush1.msra.mxu0 0.0
        %771 = vmatprep.subr.mxu0 0.0
        %772 = vmatpush1.msra.mxu0 0.0
        %773 = vmatprep.subr.mxu0 0.0
        %774 = vmatpush1.msra.mxu0 0.0
        %775 = vmatprep.subr.mxu0 0.0
        %776 = vmatpush1.msra.mxu0 0.0
        %777 = vmatprep.subr.mxu0 0.0
        %778 = vmatpush1.msra.mxu0 0.0
        %779 = vmatprep.subr.mxu0 0.0
        %780 = vmatpush1.msra.mxu0 0.0
        %781 = vmatprep.subr.mxu0 0.0
        %782 = vmatpush1.msra.mxu0 0.0
        %783 = vmatprep.subr.mxu0 0.0
        %784 = vmatpush1.msra.mxu0 0.0
        %785 = vmatprep.subr.mxu0 0.0
        %786 = vmatpush1.msra.mxu0 0.0
        %787 = vmatprep.subr.mxu0 0.0
        %788 = vmatpush1.msra.mxu0 0.0
        %789 = vmatprep.subr.mxu0 0.0
        %790 = vmatpush1.msra.mxu0 0.0
        %791 = vmatprep.subr.mxu0 0.0
        %792 = vmatpush1.msra.mxu0 0.0
        %793 = vmatprep.subr.mxu0 0.0
        %794 = vmatpush1.msra.mxu0 0.0
        %795 = vmatprep.subr.mxu0 0.0
        %796 = vmatpush1.msra.mxu0 0.0
        %797 = vmatprep.subr.mxu0 0.0
        %798 = vmatpush1.msra.mxu0 0.0
        %799 = vmatprep.subr.mxu0 0.0
        %800 = vmatpush1.msra.mxu0 0.0
        %801 = vmatprep.subr.mxu0 0.0
        %802 = vmatpush1.msra.mxu0 0.0
        %803 = vmatprep.subr.mxu0 0.0
        %804 = vmatpush1.msra.mxu0 0.0
        %805 = vmatprep.subr.mxu0 0.0
        %806 = vmatpush1.msra.mxu0 0.0
        %807 = vmatprep.subr.mxu0 0.0
        %808 = vmatpush1.msra.mxu0 0.0
        %809 = vmatprep.subr.mxu0 0.0
        %810 = vmatpush1.msra.mxu0 0.0
        %811 = vmatprep.subr.mxu0 0.0
        %812 = vmatpush1.msra.mxu0 0.0
        %813 = vmatprep.subr.mxu0 0.0
        %814 = vmatpush1.msra.mxu0 0.0
        %815 = vmatprep.mubr.f32.mxu0 0.0
        %816 = vmatmul.mubr.f32.gmra.mrb[0].mxu0 %v749
        %v817 = vpop.f32.mrb[0].mxu0
        %v818 = vadd.f32 0.0, %v817
        %v819 = vpop.f32.mrb[0].mxu0
        %820 = vdwg.mxu0
        %v821 = vrcp.pop %v747
        %v822 = vmul.f32 1.0, %v821
        %v823 = vmul.f32 %v818, %v822
        %v824 = vld [vmem:[#allocation10] sm:$0xff]
        %v826 = vsel %vm662, %v823, 0
        %828 = vmatprep.subr.mxu0 0.0
        %829 = vmatpush1.msra.mxu0 %v824
        %830 = vmatprep.subr.mxu0 0.0
        %831 = vmatpush1.msra.mxu0 0.0
        %832 = vmatprep.subr.mxu0 0.0
        %833 = vmatpush1.msra.mxu0 0.0
        %834 = vmatprep.subr.mxu0 0.0
        %835 = vmatpush1.msra.mxu0 0.0
        %836 = vmatprep.subr.mxu0 0.0
        %837 = vmatpush1.msra.mxu0 0.0
        %838 = vmatprep.subr.mxu0 0.0
        %839 = vmatpush1.msra.mxu0 0.0
        %840 = vmatprep.subr.mxu0 0.0
        %841 = vmatpush1.msra.mxu0 0.0
        %842 = vmatprep.subr.mxu0 0.0
        %843 = vmatpush1.msra.mxu0 0.0
        %844 = vmatprep.subr.mxu0 0.0
        %845 = vmatpush1.msra.mxu0 0.0
        %846 = vmatprep.subr.mxu0 0.0
        %847 = vmatpush1.msra.mxu0 0.0
        %848 = vmatprep.subr.mxu0 0.0
        %849 = vmatpush1.msra.mxu0 0.0
        %850 = vmatprep.subr.mxu0 0.0
        %851 = vmatpush1.msra.mxu0 0.0
        %852 = vmatprep.subr.mxu0 0.0
        %853 = vmatpush1.msra.mxu0 0.0
        %854 = vmatprep.subr.mxu0 0.0
        %855 = vmatpush1.msra.mxu0 0.0
        %856 = vmatprep.subr.mxu0 0.0
        %857 = vmatpush1.msra.mxu0 0.0
        %858 = vmatprep.subr.mxu0 0.0
        %859 = vmatpush1.msra.mxu0 0.0
        %860 = vmatprep.subr.mxu0 0.0
        %861 = vmatpush1.msra.mxu0 0.0
        %862 = vmatprep.subr.mxu0 0.0
        %863 = vmatpush1.msra.mxu0 0.0
        %864 = vmatprep.subr.mxu0 0.0
        %865 = vmatpush1.msra.mxu0 0.0
        %866 = vmatprep.subr.mxu0 0.0
        %867 = vmatpush1.msra.mxu0 0.0
        %868 = vmatprep.subr.mxu0 0.0
        %869 = vmatpush1.msra.mxu0 0.0
        %870 = vmatprep.subr.mxu0 0.0
        %871 = vmatpush1.msra.mxu0 0.0
        %872 = vmatprep.subr.mxu0 0.0
        %873 = vmatpush1.msra.mxu0 0.0
        %874 = vmatprep.subr.mxu0 0.0
        %875 = vmatpush1.msra.mxu0 0.0
        %876 = vmatprep.subr.mxu0 0.0
        %877 = vmatpush1.msra.mxu0 0.0
        %878 = vmatprep.subr.mxu0 0.0
        %879 = vmatpush1.msra.mxu0 0.0
        %880 = vmatprep.subr.mxu0 0.0
        %881 = vmatpush1.msra.mxu0 0.0
        %882 = vmatprep.subr.mxu0 0.0
        %883 = vmatpush1.msra.mxu0 0.0
        %884 = vmatprep.subr.mxu0 0.0
        %885 = vmatpush1.msra.mxu0 0.0
        %886 = vmatprep.subr.mxu0 0.0
        %887 = vmatpush1.msra.mxu0 0.0
        %888 = vmatprep.subr.mxu0 0.0
        %889 = vmatpush1.msra.mxu0 0.0
        %890 = vmatprep.subr.mxu0 0.0
        %891 = vmatpush1.msra.mxu0 0.0
        %892 = vmatprep.mubr.f32.mxu0 0.0
        %893 = vmatmul.mubr.f32.gmra.mrb[0].mxu0 %v826
        %v894 = vpop.f32.mrb[0].mxu0
        %v895 = vadd.f32 0.0, %v894
        %v896 = vpop.f32.mrb[0].mxu0
        %897 = vdwg.mxu0
        %v898 = vadd.f32 %v660, %v895
        %899 = vrot.lane.b32.xlu0 %v492, 120
        %v900 = vpop.permute.xlu0 %899
        %901 = vrot.lane.b32.xlu0 %v571, 120
        %v902 = vpop.permute.xlu0 %901
        %v903 = vsel %vm662, %v900, 0
        %v905 = vsel %vm662, %v902, 0
        %907 = vmatprep.subr.mxu0 0.0
        %908 = vmatpush1.xpose.msra.mxu0 %v905
        %909 = vmatprep.subr.mxu0 0.0
        %910 = vmatpush1.xpose.msra.mxu0 0.0
        %911 = vmatprep.subr.mxu0 0.0
        %912 = vmatpush1.xpose.msra.mxu0 0.0
        %913 = vmatprep.subr.mxu0 0.0
        %914 = vmatpush1.xpose.msra.mxu0 0.0
        %915 = vmatprep.subr.mxu0 0.0
        %916 = vmatpush1.xpose.msra.mxu0 0.0
        %917 = vmatprep.subr.mxu0 0.0
        %918 = vmatpush1.xpose.msra.mxu0 0.0
        %919 = vmatprep.subr.mxu0 0.0
        %920 = vmatpush1.xpose.msra.mxu0 0.0
        %921 = vmatprep.subr.mxu0 0.0
        %922 = vmatpush1.xpose.msra.mxu0 0.0
        %923 = vmatprep.subr.mxu0 0.0
        %924 = vmatpush1.xpose.msra.mxu0 0.0
        %925 = vmatprep.subr.mxu0 0.0
        %926 = vmatpush1.xpose.msra.mxu0 0.0
        %927 = vmatprep.subr.mxu0 0.0
        %928 = vmatpush1.xpose.msra.mxu0 0.0
        %929 = vmatprep.subr.mxu0 0.0
        %930 = vmatpush1.xpose.msra.mxu0 0.0
        %931 = vmatprep.subr.mxu0 0.0
        %932 = vmatpush1.xpose.msra.mxu0 0.0
        %933 = vmatprep.subr.mxu0 0.0
        %934 = vmatpush1.xpose.msra.mxu0 0.0
        %935 = vmatprep.subr.mxu0 0.0
        %936 = vmatpush1.xpose.msra.mxu0 0.0
        %937 = vmatprep.subr.mxu0 0.0
        %938 = vmatpush1.xpose.msra.mxu0 0.0
        %939 = vmatprep.subr.mxu0 0.0
        %940 = vmatpush1.xpose.msra.mxu0 0.0
        %941 = vmatprep.subr.mxu0 0.0
        %942 = vmatpush1.xpose.msra.mxu0 0.0
        %943 = vmatprep.subr.mxu0 0.0
        %944 = vmatpush1.xpose.msra.mxu0 0.0
        %945 = vmatprep.subr.mxu0 0.0
        %946 = vmatpush1.xpose.msra.mxu0 0.0
        %947 = vmatprep.subr.mxu0 0.0
        %948 = vmatpush1.xpose.msra.mxu0 0.0
        %949 = vmatprep.subr.mxu0 0.0
        %950 = vmatpush1.xpose.msra.mxu0 0.0
        %951 = vmatprep.subr.mxu0 0.0
        %952 = vmatpush1.xpose.msra.mxu0 0.0
        %953 = vmatprep.subr.mxu0 0.0
        %954 = vmatpush1.xpose.msra.mxu0 0.0
        %955 = vmatprep.subr.mxu0 0.0
        %956 = vmatpush1.xpose.msra.mxu0 0.0
        %957 = vmatprep.subr.mxu0 0.0
        %958 = vmatpush1.xpose.msra.mxu0 0.0
        %959 = vmatprep.subr.mxu0 0.0
        %960 = vmatpush1.xpose.msra.mxu0 0.0
        %961 = vmatprep.subr.mxu0 0.0
        %962 = vmatpush1.xpose.msra.mxu0 0.0
        %963 = vmatprep.subr.mxu0 0.0
        %964 = vmatpush1.xpose.msra.mxu0 0.0
        %965 = vmatprep.subr.mxu0 0.0
        %966 = vmatpush1.xpose.msra.mxu0 0.0
        %967 = vmatprep.subr.mxu0 0.0
        %968 = vmatpush1.xpose.msra.mxu0 0.0
        %969 = vmatprep.subr.mxu0 0.0
        %970 = vmatpush1.xpose.msra.mxu0 0.0
        %971 = vmatprep.mubr.f32.mxu0 0.0
        %972 = vmatmul.mubr.f32.gmra.mrb[0].mxu0 %v903
        %v973 = vpop.f32.mrb[0].mxu0
        %v974 = vadd.f32 0.0, %v973
        %v975 = vpop.f32.mrb[0].mxu0
        %976 = vdwg.mxu0
        %v977 = vsel %vm662, %v974, -inf
        %978 = vmax.xlane.f32.xlu0 %v977
        %v979 = vpop.xlane.xlu0 %978
        %v980 = vsub.f32 %v974, %v979
        %v981 = vmul.f32 %v980, 1.442695
        %v982 = vpow.pop %v981
        %v983 = vsel %vm662, %v982, 0.0
        %984 = vadd.xlane.f32.xlu0 %v983
        %v985 = vpop.xlane.xlu0 %984
        %987 = vrot.lane.b32.xlu0 %v652, 120
        %v988 = vpop.permute.xlu0 %987
        %v991 = vsel %vm662, %v982, 0
        %993 = vmatprep.subr.mxu0 0.0
        %994 = vmatpush1.msra.mxu0 %v988
        %995 = vmatprep.subr.mxu0 0.0
        %996 = vmatpush1.msra.mxu0 0.0
        %997 = vmatprep.subr.mxu0 0.0
        %998 = vmatpush1.msra.mxu0 0.0
        %999 = vmatprep.subr.mxu0 0.0
        %1000 = vmatpush1.msra.mxu0 0.0
        %1001 = vmatprep.subr.mxu0 0.0
        %1002 = vmatpush1.msra.mxu0 0.0
        %1003 = vmatprep.subr.mxu0 0.0
        %1004 = vmatpush1.msra.mxu0 0.0
        %1005 = vmatprep.subr.mxu0 0.0
        %1006 = vmatpush1.msra.mxu0 0.0
        %1007 = vmatprep.subr.mxu0 0.0
        %1008 = vmatpush1.msra.mxu0 0.0
        %1009 = vmatprep.subr.mxu0 0.0
        %1010 = vmatpush1.msra.mxu0 0.0
        %1011 = vmatprep.subr.mxu0 0.0
        %1012 = vmatpush1.msra.mxu0 0.0
        %1013 = vmatprep.subr.mxu0 0.0
        %1014 = vmatpush1.msra.mxu0 0.0
        %1015 = vmatprep.subr.mxu0 0.0
        %1016 = vmatpush1.msra.mxu0 0.0
        %1017 = vmatprep.subr.mxu0 0.0
        %1018 = vmatpush1.msra.mxu0 0.0
        %1019 = vmatprep.subr.mxu0 0.0
        %1020 = vmatpush1.msra.mxu0 0.0
        %1021 = vmatprep.subr.mxu0 0.0
        %1022 = vmatpush1.msra.mxu0 0.0
        %1023 = vmatprep.subr.mxu0 0.0
        %1024 = vmatpush1.msra.mxu0 0.0
        %1025 = vmatprep.subr.mxu0 0.0
        %1026 = vmatpush1.msra.mxu0 0.0
        %1027 = vmatprep.subr.mxu0 0.0
        %1028 = vmatpush1.msra.mxu0 0.0
        %1029 = vmatprep.subr.mxu0 0.0
        %1030 = vmatpush1.msra.mxu0 0.0
        %1031 = vmatprep.subr.mxu0 0.0
        %1032 = vmatpush1.msra.mxu0 0.0
        %1033 = vmatprep.subr.mxu0 0.0
        %1034 = vmatpush1.msra.mxu0 0.0
        %1035 = vmatprep.subr.mxu0 0.0
        %1036 = vmatpush1.msra.mxu0 0.0
        %1037 = vmatprep.subr.mxu0 0.0
        %1038 = vmatpush1.msra.mxu0 0.0
        %1039 = vmatprep.subr.mxu0 0.0
        %1040 = vmatpush1.msra.mxu0 0.0
        %1041 = vmatprep.subr.mxu0 0.0
        %1042 = vmatpush1.msra.mxu0 0.0
        %1043 = vmatprep.subr.mxu0 0.0
        %1044 = vmatpush1.msra.mxu0 0.0
        %1045 = vmatprep.subr.mxu0 0.0
        %1046 = vmatpush1.msra.mxu0 0.0
        %1047 = vmatprep.subr.mxu0 0.0
        %1048 = vmatpush1.msra.mxu0 0.0
        %1049 = vmatprep.subr.mxu0 0.0
        %1050 = vmatpush1.msra.mxu0 0.0
        %1051 = vmatprep.subr.mxu0 0.0
        %1052 = vmatpush1.msra.mxu0 0.0
        %1053 = vmatprep.subr.mxu0 0.0
        %1054 = vmatpush1.msra.mxu0 0.0
        %1055 = vmatprep.subr.mxu0 0.0
        %1056 = vmatpush1.msra.mxu0 0.0
        %1057 = vmatprep.mubr.f32.mxu0 0.0
        %1058 = vmatmul.mubr.f32.gmra.mrb[0].mxu0 %v991
        %v1059 = vpop.f32.mrb[0].mxu0
        %v1060 = vadd.f32 0.0, %v1059
        %v1061 = vpop.f32.mrb[0].mxu0
        %1062 = vdwg.mxu0
        %v1063 = vrcp.pop %v985
        %v1064 = vmul.f32 1.0, %v1063
        %v1065 = vmul.f32 %v1060, %v1064
        %v1066 = vld [vmem:[#allocation10 + $0x8] sm:$0xff]
        %v1068 = vsel %vm662, %v1065, 0
        %1070 = vmatprep.subr.mxu0 0.0
        %1071 = vmatpush1.msra.mxu0 %v1066
        %1072 = vmatprep.subr.mxu0 0.0
        %1073 = vmatpush1.msra.mxu0 0.0
        %1074 = vmatprep.subr.mxu0 0.0
        %1075 = vmatpush1.msra.mxu0 0.0
        %1076 = vmatprep.subr.mxu0 0.0
        %1077 = vmatpush1.msra.mxu0 0.0
        %1078 = vmatprep.subr.mxu0 0.0
        %1079 = vmatpush1.msra.mxu0 0.0
        %1080 = vmatprep.subr.mxu0 0.0
        %1081 = vmatpush1.msra.mxu0 0.0
        %1082 = vmatprep.subr.mxu0 0.0
        %1083 = vmatpush1.msra.mxu0 0.0
        %1084 = vmatprep.subr.mxu0 0.0
        %1085 = vmatpush1.msra.mxu0 0.0
        %1086 = vmatprep.subr.mxu0 0.0
        %1087 = vmatpush1.msra.mxu0 0.0
        %1088 = vmatprep.subr.mxu0 0.0
        %1089 = vmatpush1.msra.mxu0 0.0
        %1090 = vmatprep.subr.mxu0 0.0
        %1091 = vmatpush1.msra.mxu0 0.0
        %1092 = vmatprep.subr.mxu0 0.0
        %1093 = vmatpush1.msra.mxu0 0.0
        %1094 = vmatprep.subr.mxu0 0.0
        %1095 = vmatpush1.msra.mxu0 0.0
        %1096 = vmatprep.subr.mxu0 0.0
        %1097 = vmatpush1.msra.mxu0 0.0
        %1098 = vmatprep.subr.mxu0 0.0
        %1099 = vmatpush1.msra.mxu0 0.0
        %1100 = vmatprep.subr.mxu0 0.0
        %1101 = vmatpush1.msra.mxu0 0.0
        %1102 = vmatprep.subr.mxu0 0.0
        %1103 = vmatpush1.msra.mxu0 0.0
        %1104 = vmatprep.subr.mxu0 0.0
        %1105 = vmatpush1.msra.mxu0 0.0
        %1106 = vmatprep.subr.mxu0 0.0
        %1107 = vmatpush1.msra.mxu0 0.0
        %1108 = vmatprep.subr.mxu0 0.0
        %1109 = vmatpush1.msra.mxu0 0.0
        %1110 = vmatprep.subr.mxu0 0.0
        %1111 = vmatpush1.msra.mxu0 0.0
        %1112 = vmatprep.subr.mxu0 0.0
        %1113 = vmatpush1.msra.mxu0 0.0
        %1114 = vmatprep.subr.mxu0 0.0
        %1115 = vmatpush1.msra.mxu0 0.0
        %1116 = vmatprep.subr.mxu0 0.0
        %1117 = vmatpush1.msra.mxu0 0.0
        %1118 = vmatprep.subr.mxu0 0.0
        %1119 = vmatpush1.msra.mxu0 0.0
        %1120 = vmatprep.subr.mxu0 0.0
        %1121 = vmatpush1.msra.mxu0 0.0
        %1122 = vmatprep.subr.mxu0 0.0
        %1123 = vmatpush1.msra.mxu0 0.0
        %1124 = vmatprep.subr.mxu0 0.0
        %1125 = vmatpush1.msra.mxu0 0.0
        %1126 = vmatprep.subr.mxu0 0.0
        %1127 = vmatpush1.msra.mxu0 0.0
        %1128 = vmatprep.subr.mxu0 0.0
        %1129 = vmatpush1.msra.mxu0 0.0
        %1130 = vmatprep.subr.mxu0 0.0
        %1131 = vmatpush1.msra.mxu0 0.0
        %1132 = vmatprep.subr.mxu0 0.0
        %1133 = vmatpush1.msra.mxu0 0.0
        %1134 = vmatprep.mubr.f32.mxu0 0.0
        %1135 = vmatmul.mubr.f32.gmra.mrb[0].mxu0 %v1068
        %v1136 = vpop.f32.mrb[0].mxu0
        %v1137 = vadd.f32 0.0, %v1136
        %v1138 = vpop.f32.mrb[0].mxu0
        %1139 = vdwg.mxu0
        %v1140 = vadd.f32 %v898, %v1137
        %1141 = vrot.lane.b32.xlu0 %v492, 112
        %v1142 = vpop.permute.xlu0 %1141
        %1143 = vrot.lane.b32.xlu0 %v571, 112
        %v1144 = vpop.permute.xlu0 %1143
        %v1145 = vsel %vm662, %v1142, 0
        %v1147 = vsel %vm662, %v1144, 0
        %1149 = vmatprep.subr.mxu0 0.0
        %1150 = vmatpush1.xpose.msra.mxu0 %v1147
        %1151 = vmatprep.subr.mxu0 0.0
        %1152 = vmatpush1.xpose.msra.mxu0 0.0
        %1153 = vmatprep.subr.mxu0 0.0
        %1154 = vmatpush1.xpose.msra.mxu0 0.0
        %1155 = vmatprep.subr.mxu0 0.0
        %1156 = vmatpush1.xpose.msra.mxu0 0.0
        %1157 = vmatprep.subr.mxu0 0.0
        %1158 = vmatpush1.xpose.msra.mxu0 0.0
        %1159 = vmatprep.subr.mxu0 0.0
        %1160 = vmatpush1.xpose.msra.mxu0 0.0
        %1161 = vmatprep.subr.mxu0 0.0
        %1162 = vmatpush1.xpose.msra.mxu0 0.0
        %1163 = vmatprep.subr.mxu0 0.0
        %1164 = vmatpush1.xpose.msra.mxu0 0.0
        %1165 = vmatprep.subr.mxu0 0.0
        %1166 = vmatpush1.xpose.msra.mxu0 0.0
        %1167 = vmatprep.subr.mxu0 0.0
        %1168 = vmatpush1.xpose.msra.mxu0 0.0
        %1169 = vmatprep.subr.mxu0 0.0
        %1170 = vmatpush1.xpose.msra.mxu0 0.0
        %1171 = vmatprep.subr.mxu0 0.0
        %1172 = vmatpush1.xpose.msra.mxu0 0.0
        %1173 = vmatprep.subr.mxu0 0.0
        %1174 = vmatpush1.xpose.msra.mxu0 0.0
        %1175 = vmatprep.subr.mxu0 0.0
        %1176 = vmatpush1.xpose.msra.mxu0 0.0
        %1177 = vmatprep.subr.mxu0 0.0
        %1178 = vmatpush1.xpose.msra.mxu0 0.0
        %1179 = vmatprep.subr.mxu0 0.0
        %1180 = vmatpush1.xpose.msra.mxu0 0.0
        %1181 = vmatprep.subr.mxu0 0.0
        %1182 = vmatpush1.xpose.msra.mxu0 0.0
        %1183 = vmatprep.subr.mxu0 0.0
        %1184 = vmatpush1.xpose.msra.mxu0 0.0
        %1185 = vmatprep.subr.mxu0 0.0
        %1186 = vmatpush1.xpose.msra.mxu0 0.0
        %1187 = vmatprep.subr.mxu0 0.0
        %1188 = vmatpush1.xpose.msra.mxu0 0.0
        %1189 = vmatprep.subr.mxu0 0.0
        %1190 = vmatpush1.xpose.msra.mxu0 0.0
        %1191 = vmatprep.subr.mxu0 0.0
        %1192 = vmatpush1.xpose.msra.mxu0 0.0
        %1193 = vmatprep.subr.mxu0 0.0
        %1194 = vmatpush1.xpose.msra.mxu0 0.0
        %1195 = vmatprep.subr.mxu0 0.0
        %1196 = vmatpush1.xpose.msra.mxu0 0.0
        %1197 = vmatprep.subr.mxu0 0.0
        %1198 = vmatpush1.xpose.msra.mxu0 0.0
        %1199 = vmatprep.subr.mxu0 0.0
        %1200 = vmatpush1.xpose.msra.mxu0 0.0
        %1201 = vmatprep.subr.mxu0 0.0
        %1202 = vmatpush1.xpose.msra.mxu0 0.0
        %1203 = vmatprep.subr.mxu0 0.0
        %1204 = vmatpush1.xpose.msra.mxu0 0.0
        %1205 = vmatprep.subr.mxu0 0.0
        %1206 = vmatpush1.xpose.msra.mxu0 0.0
        %1207 = vmatprep.subr.mxu0 0.0
        %1208 = vmatpush1.xpose.msra.mxu0 0.0
        %1209 = vmatprep.subr.mxu0 0.0
        %1210 = vmatpush1.xpose.msra.mxu0 0.0
        %1211 = vmatprep.subr.mxu0 0.0
        %1212 = vmatpush1.xpose.msra.mxu0 0.0
        %1213 = vmatprep.mubr.f32.mxu0 0.0
        %1214 = vmatmul.mubr.f32.gmra.mrb[0].mxu0 %v1145
        %v1215 = vpop.f32.mrb[0].mxu0
        %v1216 = vadd.f32 0.0, %v1215
        %v1217 = vpop.f32.mrb[0].mxu0
        %1218 = vdwg.mxu0
        %v1219 = vsel %vm662, %v1216, -inf
        %1220 = vmax.xlane.f32.xlu0 %v1219
        %v1221 = vpop.xlane.xlu0 %1220
        %v1222 = vsub.f32 %v1216, %v1221
        %v1223 = vmul.f32 %v1222, 1.442695
        %v1224 = vpow.pop %v1223
        %v1225 = vsel %vm662, %v1224, 0.0
        %1226 = vadd.xlane.f32.xlu0 %v1225
        %v1227 = vpop.xlane.xlu0 %1226
        %1228 = vrot.lane.b32.xlu0 %v652, 112
        %v1229 = vpop.permute.xlu0 %1228
        %v1232 = vsel %vm662, %v1224, 0
        %1234 = vmatprep.subr.mxu0 0.0
        %1235 = vmatpush1.msra.mxu0 %v1229
        %1236 = vmatprep.subr.mxu0 0.0
        %1237 = vmatpush1.msra.mxu0 0.0
        %1238 = vmatprep.subr.mxu0 0.0
        %1239 = vmatpush1.msra.mxu0 0.0
        %1240 = vmatprep.subr.mxu0 0.0
        %1241 = vmatpush1.msra.mxu0 0.0
        %1242 = vmatprep.subr.mxu0 0.0
        %1243 = vmatpush1.msra.mxu0 0.0
        %1244 = vmatprep.subr.mxu0 0.0
        %1245 = vmatpush1.msra.mxu0 0.0
        %1246 = vmatprep.subr.mxu0 0.0
        %1247 = vmatpush1.msra.mxu0 0.0
        %1248 = vmatprep.subr.mxu0 0.0
        %1249 = vmatpush1.msra.mxu0 0.0
        %1250 = vmatprep.subr.mxu0 0.0
        %1251 = vmatpush1.msra.mxu0 0.0
        %1252 = vmatprep.subr.mxu0 0.0
        %1253 = vmatpush1.msra.mxu0 0.0
        %1254 = vmatprep.subr.mxu0 0.0
        %1255 = vmatpush1.msra.mxu0 0.0
        %1256 = vmatprep.subr.mxu0 0.0
        %1257 = vmatpush1.msra.mxu0 0.0
        %1258 = vmatprep.subr.mxu0 0.0
        %1259 = vmatpush1.msra.mxu0 0.0
        %1260 = vmatprep.subr.mxu0 0.0
        %1261 = vmatpush1.msra.mxu0 0.0
        %1262 = vmatprep.subr.mxu0 0.0
        %1263 = vmatpush1.msra.mxu0 0.0
        %1264 = vmatprep.subr.mxu0 0.0
        %1265 = vmatpush1.msra.mxu0 0.0
        %1266 = vmatprep.subr.mxu0 0.0
        %1267 = vmatpush1.msra.mxu0 0.0
        %1268 = vmatprep.subr.mxu0 0.0
        %1269 = vmatpush1.msra.mxu0 0.0
        %1270 = vmatprep.subr.mxu0 0.0
        %1271 = vmatpush1.msra.mxu0 0.0
        %1272 = vmatprep.subr.mxu0 0.0
        %1273 = vmatpush1.msra.mxu0 0.0
        %1274 = vmatprep.subr.mxu0 0.0
        %1275 = vmatpush1.msra.mxu0 0.0
        %1276 = vmatprep.subr.mxu0 0.0
        %1277 = vmatpush1.msra.mxu0 0.0
        %1278 = vmatprep.subr.mxu0 0.0
        %1279 = vmatpush1.msra.mxu0 0.0
        %1280 = vmatprep.subr.mxu0 0.0
        %1281 = vmatpush1.msra.mxu0 0.0
        %1282 = vmatprep.subr.mxu0 0.0
        %1283 = vmatpush1.msra.mxu0 0.0
        %1284 = vmatprep.subr.mxu0 0.0
        %1285 = vmatpush1.msra.mxu0 0.0
        %1286 = vmatprep.subr.mxu0 0.0
        %1287 = vmatpush1.msra.mxu0 0.0
        %1288 = vmatprep.subr.mxu0 0.0
        %1289 = vmatpush1.msra.mxu0 0.0
        %1290 = vmatprep.subr.mxu0 0.0
        %1291 = vmatpush1.msra.mxu0 0.0
        %1292 = vmatprep.subr.mxu0 0.0
        %1293 = vmatpush1.msra.mxu0 0.0
        %1294 = vmatprep.subr.mxu0 0.0
        %1295 = vmatpush1.msra.mxu0 0.0
        %1296 = vmatprep.subr.mxu0 0.0
        %1297 = vmatpush1.msra.mxu0 0.0
        %1298 = vmatprep.mubr.f32.mxu0 0.0
        %1299 = vmatmul.mubr.f32.gmra.mrb[0].mxu0 %v1232
        %v1300 = vpop.f32.mrb[0].mxu0
        %v1301 = vadd.f32 0.0, %v1300
        %v1302 = vpop.f32.mrb[0].mxu0
        %1303 = vdwg.mxu0
        %v1304 = vrcp.pop %v1227
        %v1305 = vmul.f32 1.0, %v1304
        %v1306 = vmul.f32 %v1301, %v1305
        %v1307 = vld [vmem:[#allocation10 + $0x10] sm:$0xff]
        %v1309 = vsel %vm662, %v1306, 0
        %1311 = vmatprep.subr.mxu0 0.0
        %1312 = vmatpush1.msra.mxu0 %v1307
        %1313 = vmatprep.subr.mxu0 0.0
        %1314 = vmatpush1.msra.mxu0 0.0
        %1315 = vmatprep.subr.mxu0 0.0
        %1316 = vmatpush1.msra.mxu0 0.0
        %1317 = vmatprep.subr.mxu0 0.0
        %1318 = vmatpush1.msra.mxu0 0.0
        %1319 = vmatprep.subr.mxu0 0.0
        %1320 = vmatpush1.msra.mxu0 0.0
        %1321 = vmatprep.subr.mxu0 0.0
        %1322 = vmatpush1.msra.mxu0 0.0
        %1323 = vmatprep.subr.mxu0 0.0
        %1324 = vmatpush1.msra.mxu0 0.0
        %1325 = vmatprep.subr.mxu0 0.0
        %1326 = vmatpush1.msra.mxu0 0.0
        %1327 = vmatprep.subr.mxu0 0.0
        %1328 = vmatpush1.msra.mxu0 0.0
        %1329 = vmatprep.subr.mxu0 0.0
        %1330 = vmatpush1.msra.mxu0 0.0
        %1331 = vmatprep.subr.mxu0 0.0
        %1332 = vmatpush1.msra.mxu0 0.0
        %1333 = vmatprep.subr.mxu0 0.0
        %1334 = vmatpush1.msra.mxu0 0.0
        %1335 = vmatprep.subr.mxu0 0.0
        %1336 = vmatpush1.msra.mxu0 0.0
        %1337 = vmatprep.subr.mxu0 0.0
        %1338 = vmatpush1.msra.mxu0 0.0
        %1339 = vmatprep.subr.mxu0 0.0
        %1340 = vmatpush1.msra.mxu0 0.0
        %1341 = vmatprep.subr.mxu0 0.0
        %1342 = vmatpush1.msra.mxu0 0.0
        %1343 = vmatprep.subr.mxu0 0.0
        %1344 = vmatpush1.msra.mxu0 0.0
        %1345 = vmatprep.subr.mxu0 0.0
        %1346 = vmatpush1.msra.mxu0 0.0
        %1347 = vmatprep.subr.mxu0 0.0
        %1348 = vmatpush1.msra.mxu0 0.0
        %1349 = vmatprep.subr.mxu0 0.0
        %1350 = vmatpush1.msra.mxu0 0.0
        %1351 = vmatprep.subr.mxu0 0.0
        %1352 = vmatpush1.msra.mxu0 0.0
        %1353 = vmatprep.subr.mxu0 0.0
        %1354 = vmatpush1.msra.mxu0 0.0
        %1355 = vmatprep.subr.mxu0 0.0
        %1356 = vmatpush1.msra.mxu0 0.0
        %1357 = vmatprep.subr.mxu0 0.0
        %1358 = vmatpush1.msra.mxu0 0.0
        %1359 = vmatprep.subr.mxu0 0.0
        %1360 = vmatpush1.msra.mxu0 0.0
        %1361 = vmatprep.subr.mxu0 0.0
        %1362 = vmatpush1.msra.mxu0 0.0
        %1363 = vmatprep.subr.mxu0 0.0
        %1364 = vmatpush1.msra.mxu0 0.0
        %1365 = vmatprep.subr.mxu0 0.0
        %1366 = vmatpush1.msra.mxu0 0.0
        %1367 = vmatprep.subr.mxu0 0.0
        %1368 = vmatpush1.msra.mxu0 0.0
        %1369 = vmatprep.subr.mxu0 0.0
        %1370 = vmatpush1.msra.mxu0 0.0
        %1371 = vmatprep.subr.mxu0 0.0
        %1372 = vmatpush1.msra.mxu0 0.0
        %1373 = vmatprep.subr.mxu0 0.0
        %1374 = vmatpush1.msra.mxu0 0.0
        %1375 = vmatprep.mubr.f32.mxu0 0.0
        %1376 = vmatmul.mubr.f32.gmra.mrb[0].mxu0 %v1309
        %v1377 = vpop.f32.mrb[0].mxu0
        %v1378 = vadd.f32 0.0, %v1377
        %v1379 = vpop.f32.mrb[0].mxu0
        %1380 = vdwg.mxu0
        %v1381 = vadd.f32 %v1140, %v1378
        %1382 = vrot.lane.b32.xlu0 %v492, 104
        %v1383 = vpop.permute.xlu0 %1382
        %1384 = vrot.lane.b32.xlu0 %v571, 104
        %v1385 = vpop.permute.xlu0 %1384
        %v1386 = vsel %vm662, %v1383, 0
        %v1388 = vsel %vm662, %v1385, 0
        %1390 = vmatprep.subr.mxu0 0.0
        %1391 = vmatpush1.xpose.msra.mxu0 %v1388
        %1392 = vmatprep.subr.mxu0 0.0
        %1393 = vmatpush1.xpose.msra.mxu0 0.0
        %1394 = vmatprep.subr.mxu0 0.0
        %1395 = vmatpush1.xpose.msra.mxu0 0.0
        %1396 = vmatprep.subr.mxu0 0.0
        %1397 = vmatpush1.xpose.msra.mxu0 0.0
        %1398 = vmatprep.subr.mxu0 0.0
        %1399 = vmatpush1.xpose.msra.mxu0 0.0
        %1400 = vmatprep.subr.mxu0 0.0
        %1401 = vmatpush1.xpose.msra.mxu0 0.0
        %1402 = vmatprep.subr.mxu0 0.0
        %1403 = vmatpush1.xpose.msra.mxu0 0.0
        %1404 = vmatprep.subr.mxu0 0.0
        %1405 = vmatpush1.xpose.msra.mxu0 0.0
        %1406 = vmatprep.subr.mxu0 0.0
        %1407 = vmatpush1.xpose.msra.mxu0 0.0
        %1408 = vmatprep.subr.mxu0 0.0
        %1409 = vmatpush1.xpose.msra.mxu0 0.0
        %1410 = vmatprep.subr.mxu0 0.0
        %1411 = vmatpush1.xpose.msra.mxu0 0.0
        %1412 = vmatprep.subr.mxu0 0.0
        %1413 = vmatpush1.xpose.msra.mxu0 0.0
        %1414 = vmatprep.subr.mxu0 0.0
        %1415 = vmatpush1.xpose.msra.mxu0 0.0
        %1416 = vmatprep.subr.mxu0 0.0
        %1417 = vmatpush1.xpose.msra.mxu0 0.0
        %1418 = vmatprep.subr.mxu0 0.0
        %1419 = vmatpush1.xpose.msra.mxu0 0.0
        %1420 = vmatprep.subr.mxu0 0.0
        %1421 = vmatpush1.xpose.msra.mxu0 0.0
        %1422 = vmatprep.subr.mxu0 0.0
        %1423 = vmatpush1.xpose.msra.mxu0 0.0
        %1424 = vmatprep.subr.mxu0 0.0
        %1425 = vmatpush1.xpose.msra.mxu0 0.0
        %1426 = vmatprep.subr.mxu0 0.0
        %1427 = vmatpush1.xpose.msra.mxu0 0.0
        %1428 = vmatprep.subr.mxu0 0.0
        %1429 = vmatpush1.xpose.msra.mxu0 0.0
        %1430 = vmatprep.subr.mxu0 0.0
        %1431 = vmatpush1.xpose.msra.mxu0 0.0
        %1432 = vmatprep.subr.mxu0 0.0
        %1433 = vmatpush1.xpose.msra.mxu0 0.0
        %1434 = vmatprep.subr.mxu0 0.0
        %1435 = vmatpush1.xpose.msra.mxu0 0.0
        %1436 = vmatprep.subr.mxu0 0.0
        %1437 = vmatpush1.xpose.msra.mxu0 0.0
        %1438 = vmatprep.subr.mxu0 0.0
        %1439 = vmatpush1.xpose.msra.mxu0 0.0
        %1440 = vmatprep.subr.mxu0 0.0
        %1441 = vmatpush1.xpose.msra.mxu0 0.0
        %1442 = vmatprep.subr.mxu0 0.0
        %1443 = vmatpush1.xpose.msra.mxu0 0.0
        %1444 = vmatprep.subr.mxu0 0.0
        %1445 = vmatpush1.xpose.msra.mxu0 0.0
        %1446 = vmatprep.subr.mxu0 0.0
        %1447 = vmatpush1.xpose.msra.mxu0 0.0
        %1448 = vmatprep.subr.mxu0 0.0
        %1449 = vmatpush1.xpose.msra.mxu0 0.0
        %1450 = vmatprep.subr.mxu0 0.0
        %1451 = vmatpush1.xpose.msra.mxu0 0.0
        %1452 = vmatprep.subr.mxu0 0.0
        %1453 = vmatpush1.xpose.msra.mxu0 0.0
        %1454 = vmatprep.mubr.f32.mxu0 0.0
        %1455 = vmatmul.mubr.f32.gmra.mrb[0].mxu0 %v1386
        %v1456 = vpop.f32.mrb[0].mxu0
        %v1457 = vadd.f32 0.0, %v1456
        %v1458 = vpop.f32.mrb[0].mxu0
        %1459 = vdwg.mxu0
        %v1460 = vsel %vm662, %v1457, -inf
        %1461 = vmax.xlane.f32.xlu0 %v1460
        %v1462 = vpop.xlane.xlu0 %1461
        %v1463 = vsub.f32 %v1457, %v1462
        %v1464 = vmul.f32 %v1463, 1.442695
        %v1465 = vpow.pop %v1464
        %v1466 = vsel %vm662, %v1465, 0.0
        %1467 = vadd.xlane.f32.xlu0 %v1466
        %v1468 = vpop.xlane.xlu0 %1467
        %1469 = vrot.lane.b32.xlu0 %v652, 104
        %v1470 = vpop.permute.xlu0 %1469
        %v1473 = vsel %vm662, %v1465, 0
        %1475 = vmatprep.subr.mxu0 0.0
        %1476 = vmatpush1.msra.mxu0 %v1470
        %1477 = vmatprep.subr.mxu0 0.0
        %1478 = vmatpush1.msra.mxu0 0.0
        %1479 = vmatprep.subr.mxu0 0.0
        %1480 = vmatpush1.msra.mxu0 0.0
        %1481 = vmatprep.subr.mxu0 0.0
        %1482 = vmatpush1.msra.mxu0 0.0
        %1483 = vmatprep.subr.mxu0 0.0
        %1484 = vmatpush1.msra.mxu0 0.0
        %1485 = vmatprep.subr.mxu0 0.0
        %1486 = vmatpush1.msra.mxu0 0.0
        %1487 = vmatprep.subr.mxu0 0.0
        %1488 = vmatpush1.msra.mxu0 0.0
        %1489 = vmatprep.subr.mxu0 0.0
        %1490 = vmatpush1.msra.mxu0 0.0
        %1491 = vmatprep.subr.mxu0 0.0
        %1492 = vmatpush1.msra.mxu0 0.0
        %1493 = vmatprep.subr.mxu0 0.0
        %1494 = vmatpush1.msra.mxu0 0.0
        %1495 = vmatprep.subr.mxu0 0.0
        %1496 = vmatpush1.msra.mxu0 0.0
        %1497 = vmatprep.subr.mxu0 0.0
        %1498 = vmatpush1.msra.mxu0 0.0
        %1499 = vmatprep.subr.mxu0 0.0
        %1500 = vmatpush1.msra.mxu0 0.0
        %1501 = vmatprep.subr.mxu0 0.0
        %1502 = vmatpush1.msra.mxu0 0.0
        %1503 = vmatprep.subr.mxu0 0.0
        %1504 = vmatpush1.msra.mxu0 0.0
        %1505 = vmatprep.subr.mxu0 0.0
        %1506 = vmatpush1.msra.mxu0 0.0
        %1507 = vmatprep.subr.mxu0 0.0
        %1508 = vmatpush1.msra.mxu0 0.0
        %1509 = vmatprep.subr.mxu0 0.0
        %1510 = vmatpush1.msra.mxu0 0.0
        %1511 = vmatprep.subr.mxu0 0.0
        %1512 = vmatpush1.msra.mxu0 0.0
        %1513 = vmatprep.subr.mxu0 0.0
        %1514 = vmatpush1.msra.mxu0 0.0
        %1515 = vmatprep.subr.mxu0 0.0
        %1516 = vmatpush1.msra.mxu0 0.0
        %1517 = vmatprep.subr.mxu0 0.0
        %1518 = vmatpush1.msra.mxu0 0.0
        %1519 = vmatprep.subr.mxu0 0.0
        %1520 = vmatpush1.msra.mxu0 0.0
        %1521 = vmatprep.subr.mxu0 0.0
        %1522 = vmatpush1.msra.mxu0 0.0
        %1523 = vmatprep.subr.mxu0 0.0
        %1524 = vmatpush1.msra.mxu0 0.0
        %1525 = vmatprep.subr.mxu0 0.0
        %1526 = vmatpush1.msra.mxu0 0.0
        %1527 = vmatprep.subr.mxu0 0.0
        %1528 = vmatpush1.msra.mxu0 0.0
        %1529 = vmatprep.subr.mxu0 0.0
        %1530 = vmatpush1.msra.mxu0 0.0
        %1531 = vmatprep.subr.mxu0 0.0
        %1532 = vmatpush1.msra.mxu0 0.0
        %1533 = vmatprep.subr.mxu0 0.0
        %1534 = vmatpush1.msra.mxu0 0.0
        %1535 = vmatprep.subr.mxu0 0.0
        %1536 = vmatpush1.msra.mxu0 0.0
        %1537 = vmatprep.subr.mxu0 0.0
        %1538 = vmatpush1.msra.mxu0 0.0
        %1539 = vmatprep.mubr.f32.mxu0 0.0
        %1540 = vmatmul.mubr.f32.gmra.mrb[0].mxu0 %v1473
        %v1541 = vpop.f32.mrb[0].mxu0
        %v1542 = vadd.f32 0.0, %v1541
        %v1543 = vpop.f32.mrb[0].mxu0
        %1544 = vdwg.mxu0
        %v1545 = vrcp.pop %v1468
        %v1546 = vmul.f32 1.0, %v1545
        %v1547 = vmul.f32 %v1542, %v1546
        %v1548 = vld [vmem:[#allocation10 + $0x18] sm:$0xff]
        %v1550 = vsel %vm662, %v1547, 0
        %1552 = vmatprep.subr.mxu0 0.0
        %1553 = vmatpush1.msra.mxu0 %v1548
        %1554 = vmatprep.subr.mxu0 0.0
        %1555 = vmatpush1.msra.mxu0 0.0
        %1556 = vmatprep.subr.mxu0 0.0
        %1557 = vmatpush1.msra.mxu0 0.0
        %1558 = vmatprep.subr.mxu0 0.0
        %1559 = vmatpush1.msra.mxu0 0.0
        %1560 = vmatprep.subr.mxu0 0.0
        %1561 = vmatpush1.msra.mxu0 0.0
        %1562 = vmatprep.subr.mxu0 0.0
        %1563 = vmatpush1.msra.mxu0 0.0
        %1564 = vmatprep.subr.mxu0 0.0
        %1565 = vmatpush1.msra.mxu0 0.0
        %1566 = vmatprep.subr.mxu0 0.0
        %1567 = vmatpush1.msra.mxu0 0.0
        %1568 = vmatprep.subr.mxu0 0.0
        %1569 = vmatpush1.msra.mxu0 0.0
        %1570 = vmatprep.subr.mxu0 0.0
        %1571 = vmatpush1.msra.mxu0 0.0
        %1572 = vmatprep.subr.mxu0 0.0
        %1573 = vmatpush1.msra.mxu0 0.0
        %1574 = vmatprep.subr.mxu0 0.0
        %1575 = vmatpush1.msra.mxu0 0.0
        %1576 = vmatprep.subr.mxu0 0.0
        %1577 = vmatpush1.msra.mxu0 0.0
        %1578 = vmatprep.subr.mxu0 0.0
        %1579 = vmatpush1.msra.mxu0 0.0
        %1580 = vmatprep.subr.mxu0 0.0
        %1581 = vmatpush1.msra.mxu0 0.0
        %1582 = vmatprep.subr.mxu0 0.0
        %1583 = vmatpush1.msra.mxu0 0.0
        %1584 = vmatprep.subr.mxu0 0.0
        %1585 = vmatpush1.msra.mxu0 0.0
        %1586 = vmatprep.subr.mxu0 0.0
        %1587 = vmatpush1.msra.mxu0 0.0
        %1588 = vmatprep.subr.mxu0 0.0
        %1589 = vmatpush1.msra.mxu0 0.0
        %1590 = vmatprep.subr.mxu0 0.0
        %1591 = vmatpush1.msra.mxu0 0.0
        %1592 = vmatprep.subr.mxu0 0.0
        %1593 = vmatpush1.msra.mxu0 0.0
        %1594 = vmatprep.subr.mxu0 0.0
        %1595 = vmatpush1.msra.mxu0 0.0
        %1596 = vmatprep.subr.mxu0 0.0
        %1597 = vmatpush1.msra.mxu0 0.0
        %1598 = vmatprep.subr.mxu0 0.0
        %1599 = vmatpush1.msra.mxu0 0.0
        %1600 = vmatprep.subr.mxu0 0.0
        %1601 = vmatpush1.msra.mxu0 0.0
        %1602 = vmatprep.subr.mxu0 0.0
        %1603 = vmatpush1.msra.mxu0 0.0
        %1604 = vmatprep.subr.mxu0 0.0
        %1605 = vmatpush1.msra.mxu0 0.0
        %1606 = vmatprep.subr.mxu0 0.0
        %1607 = vmatpush1.msra.mxu0 0.0
        %1608 = vmatprep.subr.mxu0 0.0
        %1609 = vmatpush1.msra.mxu0 0.0
        %1610 = vmatprep.subr.mxu0 0.0
        %1611 = vmatpush1.msra.mxu0 0.0
        %1612 = vmatprep.subr.mxu0 0.0
        %1613 = vmatpush1.msra.mxu0 0.0
        %1614 = vmatprep.subr.mxu0 0.0
        %1615 = vmatpush1.msra.mxu0 0.0
        %1616 = vmatprep.mubr.f32.mxu0 0.0
        %1617 = vmatmul.mubr.f32.gmra.mrb[0].mxu0 %v1550
        %v1618 = vpop.f32.mrb[0].mxu0
        %v1619 = vadd.f32 0.0, %v1618
        %v1620 = vpop.f32.mrb[0].mxu0
        %1621 = vdwg.mxu0
        %v1622 = vadd.f32 %v1381, %v1619
        %1623 = vst.msk [vmem:[%s405] sm:$0xff] %vm418, %v1622
        %s1624 = sand.u32 %s230, 1
        %s1625 = scalar_lea.sflag [#allocation4], %s1624
        %s1626 = sand.u32 %s230, 1
        %s1627 = smul.addr %s1626, 8
        %s1628 = scalar_lea.vmem [#allocation11], %s1627
        // Predicated region
        $region77: #{tpu_custom_call.1} parent=55 // pred_check
          %p1629 = pneg %p240
        $region78: #{tpu_custom_call.1} parent=55 // pred_check_branch
          %1631 = sbr.rel (%p1629) target = $region80
        $region79: #{tpu_custom_call.1} parent=55 // pred_region
          %s1633 = ssub.s32 128, 128
          %1634 = vsyncadd %s1625, %s1633
          %s1635 = smul.addr %s28, 128
          %s1636 = scalar_lea.hbm %s9, %s1635
          %s1638 = sshll.u32 %s1628, 4
          %s1639 = int_to_ptr.vmem [resolvable:$true] %s1638
          %1641 = dma.vmem_to_hbm [thread:$0]  %s1639, 128, %s1636, %s1625
        $region80: #{tpu_custom_call.1} parent=55 // pred_fallthru
          _
      $region56: #{tpu_custom_call.1} parent=5 // pred_fallthru
        _
      %p1642 = scmp.le.s32.totalorder 2, %s23
      // Predicated region
      $region81: #{tpu_custom_call.1} parent=5 // pred_check
        %p1643 = pneg %p1642
      $region82: #{tpu_custom_call.1} parent=5 // pred_check_branch
        %1645 = sbr.rel (%p1643) target = $region84
      $region83: #{tpu_custom_call.1} parent=5 // pred_region
        %s1646 = ssub.s32 %s23, 2
        // Predicated region
        $region85: #{tpu_custom_call.1} parent=83 // pred_check
          %p1647 = pneg %p246
        $region86: #{tpu_custom_call.1} parent=83 // pred_check_branch
          %1649 = sbr.rel (%p1647) target = $region88
        $region87: #{tpu_custom_call.1} parent=83 // pred_region
          %s1650 = sand.u32 %s231, 1
          %s1651 = scalar_lea.sflag [#allocation4], %s1650
          %s1652 = sand.u32 %s231, 1
          %s1653 = smul.addr %s1652, 8
          %s1654 = scalar_lea.vmem [#allocation11], %s1653
          %1655 = dma.done %s1651, 128
        $region88: #{tpu_custom_call.1} parent=83 // pred_fallthru
          _
      $region84: #{tpu_custom_call.1} parent=5 // pred_fallthru
        _
    $region6: #{tpu_custom_call.1} parent=1 // loop_footer
      %s27 = sadd.s32 1, %s23
    $region7: #{tpu_custom_call.1} parent=1 // loop_footer_branch
      %22 = sbr.rel target = $region3
    $region8: #{tpu_custom_call.1} parent=1 // loop_exit
      _
    %1656 = vsyncpa [#allocation3], 1
    %s1657 = scalar_lea.sflag [#allocation3], 1
    %1658 = vsyncpa %s1657, 1
    %1659 = vsyncpa [#allocation6], 1
    %1660 = vsyncpa [#allocation9], 1
    %1661 = vsyncpa [#allocation4], 1
    %s1662 = scalar_lea.sflag [#allocation4], 1
    %1663 = vsyncpa %s1662, 1

</llo_original>
